<compile_context>
chip_gen: v5e
topology: v5e:2x2
jax: 0.10.0
libtpu: 0.0.40
codegen_flags: <defaults>
</compile_context>

<pallas_src>
import functools

import numpy as np
import jax
import jax.numpy as jnp
from jax.experimental import pallas as pl
from jax.experimental.pallas import tpu as pltpu

# ---------------------------------------------------------------------------
# cfg.TRAIN.* constants (deterministic, in-script; the module's only "parameters")
# ---------------------------------------------------------------------------
BBOX_NORMALIZE_MEANS = (0.0, 0.0, 0.0, 0.0)
BBOX_NORMALIZE_STDS = (0.1, 0.1, 0.2, 0.2)
BBOX_INSIDE_WEIGHTS = (1.0, 1.0, 1.0, 1.0)
BBOX_NORMALIZE_TARGETS_PRECOMPUTED = True
TRAIN_BATCH_SIZE = 8      # rois_per_image
FG_FRACTION = 0.25
FG_THRESH = 0.5
BG_THRESH_HI = 0.5
BG_THRESH_LO = 0.0

_INV_STDS = tuple(1.0 / s for s in BBOX_NORMALIZE_STDS)


def _pad_to(n, m):
    return ((n + m - 1) // m) * m


# ---------------------------------------------------------------------------
# Pallas kernel 1: pairwise IoU (bbox_overlaps_batch) + best-gt assignment
#   rois_ref: [4, BF, NP]  (coordinate-major, roi axis lane-dense & 128-padded)
#   gt_ref  : [5, BF, K]   rows 0-3 gt coords, row 4 gt label
#   out_ref : [10, BF, NP] rows 0-3 roi coords (pass-through), 4-7 best-gt coords,
#                          8 best-gt label, 9 max overlap
# ---------------------------------------------------------------------------
def _overlaps_kernel(rois_ref, gt_ref, out_ref):
    ax1 = rois_ref[0]
    ay1 = rois_ref[1]
    ax2 = rois_ref[2]
    ay2 = rois_ref[3]
    aw = ax2 - ax1 + 1.0
    ah = ay2 - ay1 + 1.0
    a_area = aw * ah
    a_zero = (aw == 1.0) & (ah == 1.0)

    # GT preprocessing hoisted out of the K loop (single vectorized pass).
    gx1 = gt_ref[0]
    gy1 = gt_ref[1]
    gx2 = gt_ref[2]
    gy2 = gt_ref[3]
    glb = gt_ref[4]
    gw = gx2 - gx1 + 1.0
    gh = gy2 - gy1 + 1.0
    g_area = gw * gh
    g_zero = (gw == 1.0) & (gh == 1.0)

    num_gt = gt_ref.shape[2]            # small & static -> unrolled Python loop
    shp = ax1.shape

    def inter_ua(k):
        iw = jnp.maximum(
            jnp.minimum(ax2, gx2[:, k:k + 1]) - jnp.maximum(ax1, gx1[:, k:k + 1]) + 1.0,
            0.0)
        ih = jnp.maximum(
            jnp.minimum(ay2, gy2[:, k:k + 1]) - jnp.maximum(ay1, gy1[:, k:k + 1]) + 1.0,
            0.0)
        inter = iw * ih
        # gt-zero boxes get overlap 0 (matches bbox_overlaps_batch masked_fill 0)
        inter = jnp.where(g_zero[:, k:k + 1], 0.0, inter)
        ua = a_area + g_area[:, k:k + 1] - inter
        return inter, ua

    # k = 0 initialises the running best; no division anywhere in the loop.
    best_inter, best_ua = inter_ua(0)
    best_gx1 = jnp.broadcast_to(gx1[:, 0:1], shp)
    best_gy1 = jnp.broadcast_to(gy1[:, 0:1], shp)
    best_gx2 = jnp.broadcast_to(gx2[:, 0:1], shp)
    best_gy2 = jnp.broadcast_to(gy2[:, 0:1], shp)
    best_lab = jnp.broadcast_to(glb[:, 0:1], shp)

    for k in range(1, num_gt):
        inter, ua = inter_ua(k)
        # ov_k > ov_best  <=>  inter_k * best_ua > best_inter * ua_k  (all positive);
        # strict '>' keeps first-index-wins tie behaviour like torch.max.
        upd = inter * best_ua > best_inter * ua
        best_inter = jnp.where(upd, inter, best_inter)
        best_ua = jnp.where(upd, ua, best_ua)
        best_gx1 = jnp.where(upd, gx1[:, k:k + 1], best_gx1)
        best_gy1 = jnp.where(upd, gy1[:, k:k + 1], best_gy1)
        best_gx2 = jnp.where(upd, gx2[:, k:k + 1], best_gx2)
        best_gy2 = jnp.where(upd, gy2[:, k:k + 1], best_gy2)
        best_lab = jnp.where(upd, glb[:, k:k + 1], best_lab)

    # single exact reciprocal after the loop
    max_ov = best_inter * pl.reciprocal(best_ua, approx=False)
    # anchor-zero (-1) override, hoisted out of the loop; these rois are never fg/bg.
    max_ov = jnp.where(a_zero, -1.0, max_ov)

    out_ref[0] = ax1
    out_ref[1] = ay1
    out_ref[2] = ax2
    out_ref[3] = ay2
    out_ref[4] = best_gx1
    out_ref[5] = best_gy1
    out_ref[6] = best_gx2
    out_ref[7] = best_gy2
    out_ref[8] = best_lab
    out_ref[9] = max_ov


def compute_overlaps_best(rois_c, gt_c):
    """rois_c: [4, BF, NP] f32, gt_c: [5, BF, K] f32 -> [10, BF, NP] f32."""
    _, BF, NP = rois_c.shape
    K = gt_c.shape[2]
    # grid=(1,) with full-array blocks: both kernels are tiny VPU/EUP bodies; a
    # "parallel" grid axis (2nd v7x TensorCore) only pays once BF*NP grows well past
    # the ~0.35 us per-step overhead.  Total VMEM << the 16 MiB v5e scoped default.
    return pl.pallas_call(
        _overlaps_kernel,
        grid=(1,),
        in_specs=[pl.BlockSpec((4, BF, NP), lambda i: (0, 0, 0)),
                  pl.BlockSpec((5, BF, K), lambda i: (0, 0, 0))],
        out_specs=pl.BlockSpec((10, BF, NP), lambda i: (0, 0, 0)),
        out_shape=jax.ShapeDtypeStruct((10, BF, NP), jnp.float32),
        compiler_params=pltpu.CompilerParams(dimension_semantics=("arbitrary",)),
    )(rois_c, gt_c)


# ---------------------------------------------------------------------------
# Pallas kernel 2: bbox_transform_batch + normalization + label gating,
# fused with inside/outside weight computation.  Single stacked output.
#   pk_ref : [9, S, 128]   rows 0-3 ex(x1,y1,x2,y2), 4-7 gt(x1,y1,x2,y2), 8 labels
#   out_ref: [12, S, 128]  rows 0-3 targets, 4-7 inside_w, 8-11 outside_w
# ---------------------------------------------------------------------------
def _targets_kernel(pk_ref, out_ref):
    ex1 = pk_ref[0]
    ey1 = pk_ref[1]
    ex2 = pk_ref[2]
    ey2 = pk_ref[3]
    gx1 = pk_ref[4]
    gy1 = pk_ref[5]
    gx2 = pk_ref[6]
    gy2 = pk_ref[7]
    lab = pk_ref[8]

    ew = ex2 - ex1 + 1.0
    eh = ey2 - ey1 + 1.0
    gw = gx2 - gx1 + 1.0
    gh = gy2 - gy1 + 1.0

    # EUP reciprocals (otherwise-idle slot), each reused for the center delta and the
    # log-size ratio; ~1e-4 error is irrelevant after the 0.1/0.2 std normalization.
    inv_ew = pl.reciprocal(ew, approx=True)
    inv_eh = pl.reciprocal(eh, approx=True)

    ecx = ex1 + 0.5 * ew
    ecy = ey1 + 0.5 * eh
    gcx = gx1 + 0.5 * gw
    gcy = gy1 + 0.5 * gh

    dx = (gcx - ecx) * inv_ew
    dy = (gcy - ecy) * inv_eh
    dw = jnp.log(gw * inv_ew)
    dh = jnp.log(gh * inv_eh)

    if BBOX_NORMALIZE_TARGETS_PRECOMPUTED:
        dx = (dx - BBOX_NORMALIZE_MEANS[0]) * _INV_STDS[0]
        dy = (dy - BBOX_NORMALIZE_MEANS[1]) * _INV_STDS[1]
        dw = (dw - BBOX_NORMALIZE_MEANS[2]) * _INV_STDS[2]
        dh = (dh - BBOX_NORMALIZE_MEANS[3]) * _INV_STDS[3]

    maskf = (lab > 0.0).astype(jnp.float32)          # [S, 128]

    targets = (dx, dy, dw, dh)
    for c in range(4):                               # static unroll, full-vreg stores
        out_ref[c] = targets[c] * maskf
        w = BBOX_INSIDE_WEIGHTS[c] * maskf
        out_ref[4 + c] = w
        out_ref[8 + c] = jnp.where(w > 0.0, 1.0, 0.0).astype(jnp.float32)


def compute_bbox_targets(planes):
    """planes [9, S, 128] -> stacked [12, S, 128] (targets / inside_w / outside_w)."""
    _, S, L = planes.shape
    return pl.pallas_call(
        _targets_kernel,
        grid=(1,),
        in_specs=[pl.BlockSpec((9, S, L), lambda i: (0, 0, 0))],
        out_specs=pl.BlockSpec((12, S, L), lambda i: (0, 0, 0)),
        out_shape=jax.ShapeDtypeStruct((12, S, L), jnp.float32),
        compiler_params=pltpu.CompilerParams(dimension_semantics=("arbitrary",)),
    )(planes)


# ---------------------------------------------------------------------------
# Full forward: glue in JAX + two Pallas hot paths, entirely on device (jit-able)
# ---------------------------------------------------------------------------
@functools.partial(jax.jit, static_argnums=2)
def regression_target_forward(all_tubes, gt_boxes, sample_duration):
    all_tubes = jnp.asarray(all_tubes, jnp.float32)
    gt_boxes = jnp.asarray(gt_boxes, jnp.float32)
    b, n_tubes, _ = all_tubes.shape
    _, n_actions, n_frames, _ = gt_boxes.shape
    assert n_frames == sample_duration

    BF = b * sample_duration
    K = n_actions
    N = n_tubes + K                     # tube rois + appended gt rois per frame
    NP = _pad_to(N, 128)                # lane-dense roi axis for kernel 1

    # --- coordinate-major construction straight from the inputs (no big transposes) ---
    # tube coords are the same for every frame of a clip; broadcast instead of copy
    tub_c = jnp.stack([all_tubes[:, :, 1], all_tubes[:, :, 2],
                       all_tubes[:, :, 4], all_tubes[:, :, 5]], axis=0)        # [4,b,T]
    tub_c = jnp.broadcast_to(tub_c[:, :, None, :],
                             (4, b, sample_duration, n_tubes)).reshape(4, BF, n_tubes)

    gt_c = jnp.transpose(gt_boxes, (3, 0, 2, 1)).reshape(5, BF, K)  # x1,y1,x2,y2,label

    # zero-padded rois are degenerate (w=h=1) -> IoU fill = -1 -> never sampled
    rois_c = jnp.concatenate(
        [tub_c, gt_c[:4], jnp.zeros((4, BF, NP - N), jnp.float32)], axis=2)   # [4,BF,NP]

    # --- Pallas hot path #1: IoU + fused best-gt coords/label (no argmax gathers) ---
    ov_out = compute_overlaps_best(rois_c, gt_c)          # [10, BF, NP]
    max_ov = ov_out[9]                                    # [BF, NP]
    gather_src = ov_out[0:9]                              # ex coords, gt coords, label

    # --- on-device fg/bg RoI sampling (static shapes, no host round trip) ---
    # TODO(synk): original _sample_rois_pytorch uses np.random permutation/choice;
    # replaced with a deterministic first-k / cyclic selection so it can stay on device.
    rois_per_image = int(TRAIN_BATCH_SIZE / 1)
    fg_rois_per_image = int(np.round(FG_FRACTION * rois_per_image))
    fg_rois_per_image = 1 if fg_rois_per_image == 0 else fg_rois_per_image
    R = rois_per_image

    idx = jnp.arange(NP, dtype=jnp.int32)
    fg_mask = max_ov >= FG_THRESH
    bg_mask = (max_ov < BG_THRESH_HI) & (max_ov >= BG_THRESH_LO)
    fg_num = jnp.sum(fg_mask, axis=1).astype(jnp.int32)                     # [BF]
    bg_num = jnp.sum(bg_mask, axis=1).astype(jnp.int32)
    fg_order = jnp.argsort(jnp.where(fg_mask, idx[None, :], NP + idx[None, :]), axis=1)
    bg_order = jnp.argsort(jnp.where(bg_mask, idx[None, :], NP + idx[None, :]), axis=1)

    has_gt = jnp.any(gt_c[4] > 0, axis=1)                                   # [BF]

    fg_this = jnp.where(fg_num > 0,
                        jnp.where(bg_num > 0,
                                  jnp.minimum(fg_rois_per_image, fg_num),
                                  R),
                        0)
    fg_this = jnp.where(has_gt, fg_this, 0).astype(jnp.int32)
    # TODO(synk): original raises ValueError when a frame with gt has fg_num==bg_num==0;
    # not expressible on device, such a frame yields zeroed labels/targets instead.

    j = jnp.arange(R, dtype=jnp.int32)[None, :]                             # [1, R]
    fg_nz = jnp.maximum(fg_num, 1)[:, None]
    bg_nz = jnp.maximum(bg_num, 1)[:, None]
    fg_pick = jnp.take_along_axis(fg_order, j % fg_nz, axis=1)              # [BF, R]
    bg_pick = jnp.take_along_axis(bg_order, (j - fg_this[:, None]) % bg_nz, axis=1)
    is_fg_slot = j < fg_this[:, None]
    keep = jnp.where(is_fg_slot, fg_pick, bg_pick)                          # [BF, R]

    # one combined gather pulls ex coords, assigned-gt coords and labels for the keeps
    keep9 = jnp.broadcast_to(keep[None, :, :], (9, BF, R))
    picked = jnp.take_along_axis(gather_src, keep9, axis=2)                 # [9, BF, R]

    labels_batch = jnp.where(is_fg_slot & has_gt[:, None], picked[8], 0.0)  # [BF, R]

    frame_col = jnp.broadcast_to(
        jnp.arange(BF, dtype=jnp.float32)[:, None], (BF, R))[:, :, None]
    rois_batch = jnp.concatenate(
        [frame_col, jnp.transpose(picked[0:4], (1, 2, 0))], axis=2)         # [BF, R, 5]
    rois_batch = jnp.where(has_gt[:, None, None], rois_batch, 0.0)

    # --- Pallas hot path #2: regression targets + inside/outside weights (fused) ---
    # pack the frame x roi axis into full (8,128) vregs
    F = BF * R
    S = _pad_to((F + 127) // 128, 8)
    FP = S * 128
    planes = jnp.concatenate([picked[0:8], labels_batch[None]], axis=0)     # [9, BF, R]
    planes = planes.reshape(9, F)
    if FP != F:
        planes = jnp.pad(planes, ((0, 0), (0, FP - F)))   # zero pad -> ew=gw=1, no NaN
    planes = planes.reshape(9, S, 128)

    out2 = compute_bbox_targets(planes)                                     # [12, S, 128]
    out2 = jnp.transpose(out2.reshape(12, FP)[:, :F].reshape(12, BF, R), (1, 2, 0))
    bbox_targets = out2[..., 0:4]
    bbox_inside = out2[..., 4:8]
    bbox_outside = out2[..., 8:12]

    return rois_batch, labels_batch, bbox_targets, bbox_inside, bbox_outside


# ---------------------------------------------------------------------------
if __name__ == "__main__":
    key = jax.random.PRNGKey(0)
    b, n_tubes, n_actions, sample_duration = 2, 10, 3, 8
    k1, k2, k3, k4 = jax.random.split(key, 4)

    # proposal tubes [b, tubes, 7]: cols (idx, x1, y1, t1, x2, y2, t2)
    txy1 = jax.random.uniform(k1, (b, n_tubes, 2), minval=0.0, maxval=48.0)
    twh = jax.random.uniform(k2, (b, n_tubes, 2), minval=8.0, maxval=48.0)
    all_tubes = jnp.zeros((b, n_tubes, 7), jnp.float32)
    all_tubes = all_tubes.at[:, :, 1:3].set(txy1)
    all_tubes = all_tubes.at[:, :, 4:6].set(txy1 + twh)

    # gt boxes [b, n_actions, n_frames, 5]: (x1, y1, x2, y2, class)
    gxy1 = jax.random.uniform(k3, (b, n_actions, sample_duration, 2), minval=0.0, maxval=48.0)
    gwh = jax.random.uniform(k4, (b, n_actions, sample_duration, 2), minval=8.0, maxval=48.0)
    gt_boxes = jnp.zeros((b, n_actions, sample_duration, 5), jnp.float32)
    gt_boxes = gt_boxes.at[..., 0:2].set(gxy1)
    gt_boxes = gt_boxes.at[..., 2:4].set(gxy1 + gwh)
    gt_boxes = gt_boxes.at[..., 4].set(
        jnp.broadcast_to(jnp.arange(1, n_actions + 1, dtype=jnp.float32)[None, :, None],
                         (b, n_actions, sample_duration)))

    rois, labels, bbox_targets, biw, bow = regression_target_forward(
        all_tubes, gt_boxes, sample_duration)
    for o in (rois, labels, bbox_targets, biw, bow):
        jax.block_until_ready(o)
    print("KERNEL_OK")
</pallas_src>

<mosaic_0001>
module attributes {stable_mosaic.version = 11 : i64} {
  func.func @_overlaps_kernel(%arg0: i32, %arg1: memref<4x16x128xf32, #tpu.memory_space<vmem>>, %arg2: memref<5x16x3xf32, #tpu.memory_space<vmem>>, %arg3: memref<10x16x128xf32, #tpu.memory_space<vmem>>) attributes {dimension_semantics = [#tpu.dimension_semantics<arbitrary>], iteration_bounds = array<i64: 1>, scalar_prefetch = 0 : i64, scratch_operands = 0 : i64, tpu.core_type = #tpu.core_type<tc>, window_params = [{pipeline_mode = #tpu.pipeline_mode<synchronous>, transform_indices = @transform_0, window_bounds = array<i64: 4, 16, 128>}, {pipeline_mode = #tpu.pipeline_mode<synchronous>, transform_indices = @transform_1, window_bounds = array<i64: 5, 16, 3>}, {pipeline_mode = #tpu.pipeline_mode<synchronous>, transform_indices = @transform_2, window_bounds = array<i64: 10, 16, 128>}]} {
    %c0 = arith.constant 0 : index
    %c0_0 = arith.constant 0 : index
    %c0_1 = arith.constant 0 : index
    %0 = vector.load %arg1[%c0, %c0_0, %c0_1] : memref<4x16x128xf32, #tpu.memory_space<vmem>>, vector<1x16x128xf32>
    %1 = vector.shape_cast %0 : vector<1x16x128xf32> to vector<16x128xf32>
    %c1 = arith.constant 1 : index
    %c0_2 = arith.constant 0 : index
    %c0_3 = arith.constant 0 : index
    %2 = vector.load %arg1[%c1, %c0_2, %c0_3] : memref<4x16x128xf32, #tpu.memory_space<vmem>>, vector<1x16x128xf32>
    %3 = vector.shape_cast %2 : vector<1x16x128xf32> to vector<16x128xf32>
    %c2 = arith.constant 2 : index
    %c0_4 = arith.constant 0 : index
    %c0_5 = arith.constant 0 : index
    %4 = vector.load %arg1[%c2, %c0_4, %c0_5] : memref<4x16x128xf32, #tpu.memory_space<vmem>>, vector<1x16x128xf32>
    %5 = vector.shape_cast %4 : vector<1x16x128xf32> to vector<16x128xf32>
    %c3 = arith.constant 3 : index
    %c0_6 = arith.constant 0 : index
    %c0_7 = arith.constant 0 : index
    %6 = vector.load %arg1[%c3, %c0_6, %c0_7] : memref<4x16x128xf32, #tpu.memory_space<vmem>>, vector<1x16x128xf32>
    %7 = vector.shape_cast %6 : vector<1x16x128xf32> to vector<16x128xf32>
    %8 = arith.subf %5, %1 : vector<16x128xf32>
    %cst = arith.constant 1.000000e+00 : f32
    %9 = vector.broadcast %cst : f32 to vector<16x128xf32>
    %10 = arith.addf %8, %9 : vector<16x128xf32>
    %11 = arith.subf %7, %3 : vector<16x128xf32>
    %cst_8 = arith.constant 1.000000e+00 : f32
    %12 = vector.broadcast %cst_8 : f32 to vector<16x128xf32>
    %13 = arith.addf %11, %12 : vector<16x128xf32>
    %14 = arith.mulf %10, %13 : vector<16x128xf32>
    %cst_9 = arith.constant 1.000000e+00 : f32
    %15 = vector.broadcast %cst_9 : f32 to vector<16x128xf32>
    %16 = arith.cmpf oeq, %10, %15 : vector<16x128xf32>
    %cst_10 = arith.constant 1.000000e+00 : f32
    %17 = vector.broadcast %cst_10 : f32 to vector<16x128xf32>
    %18 = arith.cmpf oeq, %13, %17 : vector<16x128xf32>
    %19 = arith.andi %16, %18 : vector<16x128xi1>
    %c0_11 = arith.constant 0 : index
    %c0_12 = arith.constant 0 : index
    %c0_13 = arith.constant 0 : index
    %20 = vector.load %arg2[%c0_11, %c0_12, %c0_13] : memref<5x16x3xf32, #tpu.memory_space<vmem>>, vector<1x16x3xf32>
    %21 = vector.shape_cast %20 : vector<1x16x3xf32> to vector<16x3xf32>
    %c1_14 = arith.constant 1 : index
    %c0_15 = arith.constant 0 : index
    %c0_16 = arith.constant 0 : index
    %22 = vector.load %arg2[%c1_14, %c0_15, %c0_16] : memref<5x16x3xf32, #tpu.memory_space<vmem>>, vector<1x16x3xf32>
    %23 = vector.shape_cast %22 : vector<1x16x3xf32> to vector<16x3xf32>
    %c2_17 = arith.constant 2 : index
    %c0_18 = arith.constant 0 : index
    %c0_19 = arith.constant 0 : index
    %24 = vector.load %arg2[%c2_17, %c0_18, %c0_19] : memref<5x16x3xf32, #tpu.memory_space<vmem>>, vector<1x16x3xf32>
    %25 = vector.shape_cast %24 : vector<1x16x3xf32> to vector<16x3xf32>
    %c3_20 = arith.constant 3 : index
    %c0_21 = arith.constant 0 : index
    %c0_22 = arith.constant 0 : index
    %26 = vector.load %arg2[%c3_20, %c0_21, %c0_22] : memref<5x16x3xf32, #tpu.memory_space<vmem>>, vector<1x16x3xf32>
    %27 = vector.shape_cast %26 : vector<1x16x3xf32> to vector<16x3xf32>
    %c4 = arith.constant 4 : index
    %c0_23 = arith.constant 0 : index
    %c0_24 = arith.constant 0 : index
    %28 = vector.load %arg2[%c4, %c0_23, %c0_24] : memref<5x16x3xf32, #tpu.memory_space<vmem>>, vector<1x16x3xf32>
    %29 = vector.shape_cast %28 : vector<1x16x3xf32> to vector<16x3xf32>
    %30 = arith.subf %25, %21 : vector<16x3xf32>
    %cst_25 = arith.constant 1.000000e+00 : f32
    %31 = vector.broadcast %cst_25 : f32 to vector<16x3xf32>
    %32 = arith.addf %30, %31 : vector<16x3xf32>
    %33 = arith.subf %27, %23 : vector<16x3xf32>
    %cst_26 = arith.constant 1.000000e+00 : f32
    %34 = vector.broadcast %cst_26 : f32 to vector<16x3xf32>
    %35 = arith.addf %33, %34 : vector<16x3xf32>
    %36 = arith.mulf %32, %35 : vector<16x3xf32>
    %cst_27 = arith.constant 1.000000e+00 : f32
    %37 = vector.broadcast %cst_27 : f32 to vector<16x3xf32>
    %38 = arith.cmpf oeq, %32, %37 : vector<16x3xf32>
    %cst_28 = arith.constant 1.000000e+00 : f32
    %39 = vector.broadcast %cst_28 : f32 to vector<16x3xf32>
    %40 = arith.cmpf oeq, %35, %39 : vector<16x3xf32>
    %41 = arith.andi %38, %40 : vector<16x3xi1>
    %42 = vector.extract_strided_slice %25 {offsets = [0, 0], sizes = [16, 1], strides = [1, 1]} : vector<16x3xf32> to vector<16x1xf32>
    %43 = vector.broadcast %42 : vector<16x1xf32> to vector<16x128xf32>
    %44 = arith.minimumf %5, %43 : vector<16x128xf32>
    %45 = vector.extract_strided_slice %21 {offsets = [0, 0], sizes = [16, 1], strides = [1, 1]} : vector<16x3xf32> to vector<16x1xf32>
    %46 = vector.broadcast %45 : vector<16x1xf32> to vector<16x128xf32>
    %47 = arith.maximumf %1, %46 : vector<16x128xf32>
    %48 = arith.subf %44, %47 : vector<16x128xf32>
    %cst_29 = arith.constant 1.000000e+00 : f32
    %49 = vector.broadcast %cst_29 : f32 to vector<16x128xf32>
    %50 = arith.addf %48, %49 : vector<16x128xf32>
    %cst_30 = arith.constant 0.000000e+00 : f32
    %51 = vector.broadcast %cst_30 : f32 to vector<16x128xf32>
    %52 = arith.maximumf %50, %51 : vector<16x128xf32>
    %53 = vector.extract_strided_slice %27 {offsets = [0, 0], sizes = [16, 1], strides = [1, 1]} : vector<16x3xf32> to vector<16x1xf32>
    %54 = vector.broadcast %53 : vector<16x1xf32> to vector<16x128xf32>
    %55 = arith.minimumf %7, %54 : vector<16x128xf32>
    %56 = vector.extract_strided_slice %23 {offsets = [0, 0], sizes = [16, 1], strides = [1, 1]} : vector<16x3xf32> to vector<16x1xf32>
    %57 = vector.broadcast %56 : vector<16x1xf32> to vector<16x128xf32>
    %58 = arith.maximumf %3, %57 : vector<16x128xf32>
    %59 = arith.subf %55, %58 : vector<16x128xf32>
    %cst_31 = arith.constant 1.000000e+00 : f32
    %60 = vector.broadcast %cst_31 : f32 to vector<16x128xf32>
    %61 = arith.addf %59, %60 : vector<16x128xf32>
    %cst_32 = arith.constant 0.000000e+00 : f32
    %62 = vector.broadcast %cst_32 : f32 to vector<16x128xf32>
    %63 = arith.maximumf %61, %62 : vector<16x128xf32>
    %64 = arith.mulf %52, %63 : vector<16x128xf32>
    %65 = vector.extract_strided_slice %41 {offsets = [0, 0], sizes = [16, 1], strides = [1, 1]} : vector<16x3xi1> to vector<16x1xi1>
    %cst_33 = arith.constant 0.000000e+00 : f32
    %66 = vector.shape_cast %65 : vector<16x1xi1> to vector<16x1xi1>
    %67 = vector.broadcast %66 : vector<16x1xi1> to vector<16x128xi1>
    %68 = vector.broadcast %cst_33 : f32 to vector<16x128xf32>
    %69 = arith.select %67, %68, %64 : vector<16x128xi1>, vector<16x128xf32>
    %70 = vector.extract_strided_slice %36 {offsets = [0, 0], sizes = [16, 1], strides = [1, 1]} : vector<16x3xf32> to vector<16x1xf32>
    %71 = vector.broadcast %70 : vector<16x1xf32> to vector<16x128xf32>
    %72 = arith.addf %14, %71 : vector<16x128xf32>
    %73 = arith.subf %72, %69 : vector<16x128xf32>
    %74 = vector.extract_strided_slice %21 {offsets = [0, 0], sizes = [16, 1], strides = [1, 1]} : vector<16x3xf32> to vector<16x1xf32>
    %75 = vector.shape_cast %74 : vector<16x1xf32> to vector<16x1xf32>
    %76 = vector.broadcast %75 : vector<16x1xf32> to vector<16x128xf32>
    %77 = vector.extract_strided_slice %23 {offsets = [0, 0], sizes = [16, 1], strides = [1, 1]} : vector<16x3xf32> to vector<16x1xf32>
    %78 = vector.shape_cast %77 : vector<16x1xf32> to vector<16x1xf32>
    %79 = vector.broadcast %78 : vector<16x1xf32> to vector<16x128xf32>
    %80 = vector.extract_strided_slice %25 {offsets = [0, 0], sizes = [16, 1], strides = [1, 1]} : vector<16x3xf32> to vector<16x1xf32>
    %81 = vector.shape_cast %80 : vector<16x1xf32> to vector<16x1xf32>
    %82 = vector.broadcast %81 : vector<16x1xf32> to vector<16x128xf32>
    %83 = vector.extract_strided_slice %27 {offsets = [0, 0], sizes = [16, 1], strides = [1, 1]} : vector<16x3xf32> to vector<16x1xf32>
    %84 = vector.shape_cast %83 : vector<16x1xf32> to vector<16x1xf32>
    %85 = vector.broadcast %84 : vector<16x1xf32> to vector<16x128xf32>
    %86 = vector.extract_strided_slice %29 {offsets = [0, 0], sizes = [16, 1], strides = [1, 1]} : vector<16x3xf32> to vector<16x1xf32>
    %87 = vector.shape_cast %86 : vector<16x1xf32> to vector<16x1xf32>
    %88 = vector.broadcast %87 : vector<16x1xf32> to vector<16x128xf32>
    %89 = vector.extract_strided_slice %25 {offsets = [0, 1], sizes = [16, 1], strides = [1, 1]} : vector<16x3xf32> to vector<16x1xf32>
    %90 = vector.broadcast %89 : vector<16x1xf32> to vector<16x128xf32>
    %91 = arith.minimumf %5, %90 : vector<16x128xf32>
    %92 = vector.extract_strided_slice %21 {offsets = [0, 1], sizes = [16, 1], strides = [1, 1]} : vector<16x3xf32> to vector<16x1xf32>
    %93 = vector.broadcast %92 : vector<16x1xf32> to vector<16x128xf32>
    %94 = arith.maximumf %1, %93 : vector<16x128xf32>
    %95 = arith.subf %91, %94 : vector<16x128xf32>
    %cst_34 = arith.constant 1.000000e+00 : f32
    %96 = vector.broadcast %cst_34 : f32 to vector<16x128xf32>
    %97 = arith.addf %95, %96 : vector<16x128xf32>
    %cst_35 = arith.constant 0.000000e+00 : f32
    %98 = vector.broadcast %cst_35 : f32 to vector<16x128xf32>
    %99 = arith.maximumf %97, %98 : vector<16x128xf32>
    %100 = vector.extract_strided_slice %27 {offsets = [0, 1], sizes = [16, 1], strides = [1, 1]} : vector<16x3xf32> to vector<16x1xf32>
    %101 = vector.broadcast %100 : vector<16x1xf32> to vector<16x128xf32>
    %102 = arith.minimumf %7, %101 : vector<16x128xf32>
    %103 = vector.extract_strided_slice %23 {offsets = [0, 1], sizes = [16, 1], strides = [1, 1]} : vector<16x3xf32> to vector<16x1xf32>
    %104 = vector.broadcast %103 : vector<16x1xf32> to vector<16x128xf32>
    %105 = arith.maximumf %3, %104 : vector<16x128xf32>
    %106 = arith.subf %102, %105 : vector<16x128xf32>
    %cst_36 = arith.constant 1.000000e+00 : f32
    %107 = vector.broadcast %cst_36 : f32 to vector<16x128xf32>
    %108 = arith.addf %106, %107 : vector<16x128xf32>
    %cst_37 = arith.constant 0.000000e+00 : f32
    %109 = vector.broadcast %cst_37 : f32 to vector<16x128xf32>
    %110 = arith.maximumf %108, %109 : vector<16x128xf32>
    %111 = arith.mulf %99, %110 : vector<16x128xf32>
    %112 = vector.extract_strided_slice %41 {offsets = [0, 1], sizes = [16, 1], strides = [1, 1]} : vector<16x3xi1> to vector<16x1xi1>
    %cst_38 = arith.constant 0.000000e+00 : f32
    %113 = vector.shape_cast %112 : vector<16x1xi1> to vector<16x1xi1>
    %114 = vector.broadcast %113 : vector<16x1xi1> to vector<16x128xi1>
    %115 = vector.broadcast %cst_38 : f32 to vector<16x128xf32>
    %116 = arith.select %114, %115, %111 : vector<16x128xi1>, vector<16x128xf32>
    %117 = vector.extract_strided_slice %36 {offsets = [0, 1], sizes = [16, 1], strides = [1, 1]} : vector<16x3xf32> to vector<16x1xf32>
    %118 = vector.broadcast %117 : vector<16x1xf32> to vector<16x128xf32>
    %119 = arith.addf %14, %118 : vector<16x128xf32>
    %120 = arith.subf %119, %116 : vector<16x128xf32>
    %121 = arith.mulf %116, %73 : vector<16x128xf32>
    %122 = arith.mulf %69, %120 : vector<16x128xf32>
    %123 = arith.cmpf ogt, %121, %122 : vector<16x128xf32>
    %124 = arith.select %123, %116, %69 : vector<16x128xi1>, vector<16x128xf32>
    %125 = arith.select %123, %120, %73 : vector<16x128xi1>, vector<16x128xf32>
    %126 = vector.extract_strided_slice %21 {offsets = [0, 1], sizes = [16, 1], strides = [1, 1]} : vector<16x3xf32> to vector<16x1xf32>
    %127 = vector.shape_cast %126 : vector<16x1xf32> to vector<16x1xf32>
    %128 = vector.broadcast %127 : vector<16x1xf32> to vector<16x128xf32>
    %129 = arith.select %123, %128, %76 : vector<16x128xi1>, vector<16x128xf32>
    %130 = vector.extract_strided_slice %23 {offsets = [0, 1], sizes = [16, 1], strides = [1, 1]} : vector<16x3xf32> to vector<16x1xf32>
    %131 = vector.shape_cast %130 : vector<16x1xf32> to vector<16x1xf32>
    %132 = vector.broadcast %131 : vector<16x1xf32> to vector<16x128xf32>
    %133 = arith.select %123, %132, %79 : vector<16x128xi1>, vector<16x128xf32>
    %134 = vector.extract_strided_slice %25 {offsets = [0, 1], sizes = [16, 1], strides = [1, 1]} : vector<16x3xf32> to vector<16x1xf32>
    %135 = vector.shape_cast %134 : vector<16x1xf32> to vector<16x1xf32>
    %136 = vector.broadcast %135 : vector<16x1xf32> to vector<16x128xf32>
    %137 = arith.select %123, %136, %82 : vector<16x128xi1>, vector<16x128xf32>
    %138 = vector.extract_strided_slice %27 {offsets = [0, 1], sizes = [16, 1], strides = [1, 1]} : vector<16x3xf32> to vector<16x1xf32>
    %139 = vector.shape_cast %138 : vector<16x1xf32> to vector<16x1xf32>
    %140 = vector.broadcast %139 : vector<16x1xf32> to vector<16x128xf32>
    %141 = arith.select %123, %140, %85 : vector<16x128xi1>, vector<16x128xf32>
    %142 = vector.extract_strided_slice %29 {offsets = [0, 1], sizes = [16, 1], strides = [1, 1]} : vector<16x3xf32> to vector<16x1xf32>
    %143 = vector.shape_cast %142 : vector<16x1xf32> to vector<16x1xf32>
    %144 = vector.broadcast %143 : vector<16x1xf32> to vector<16x128xf32>
    %145 = arith.select %123, %144, %88 : vector<16x128xi1>, vector<16x128xf32>
    %146 = vector.extract_strided_slice %25 {offsets = [0, 2], sizes = [16, 1], strides = [1, 1]} : vector<16x3xf32> to vector<16x1xf32>
    %147 = vector.broadcast %146 : vector<16x1xf32> to vector<16x128xf32>
    %148 = arith.minimumf %5, %147 : vector<16x128xf32>
    %149 = vector.extract_strided_slice %21 {offsets = [0, 2], sizes = [16, 1], strides = [1, 1]} : vector<16x3xf32> to vector<16x1xf32>
    %150 = vector.broadcast %149 : vector<16x1xf32> to vector<16x128xf32>
    %151 = arith.maximumf %1, %150 : vector<16x128xf32>
    %152 = arith.subf %148, %151 : vector<16x128xf32>
    %cst_39 = arith.constant 1.000000e+00 : f32
    %153 = vector.broadcast %cst_39 : f32 to vector<16x128xf32>
    %154 = arith.addf %152, %153 : vector<16x128xf32>
    %cst_40 = arith.constant 0.000000e+00 : f32
    %155 = vector.broadcast %cst_40 : f32 to vector<16x128xf32>
    %156 = arith.maximumf %154, %155 : vector<16x128xf32>
    %157 = vector.extract_strided_slice %27 {offsets = [0, 2], sizes = [16, 1], strides = [1, 1]} : vector<16x3xf32> to vector<16x1xf32>
    %158 = vector.broadcast %157 : vector<16x1xf32> to vector<16x128xf32>
    %159 = arith.minimumf %7, %158 : vector<16x128xf32>
    %160 = vector.extract_strided_slice %23 {offsets = [0, 2], sizes = [16, 1], strides = [1, 1]} : vector<16x3xf32> to vector<16x1xf32>
    %161 = vector.broadcast %160 : vector<16x1xf32> to vector<16x128xf32>
    %162 = arith.maximumf %3, %161 : vector<16x128xf32>
    %163 = arith.subf %159, %162 : vector<16x128xf32>
    %cst_41 = arith.constant 1.000000e+00 : f32
    %164 = vector.broadcast %cst_41 : f32 to vector<16x128xf32>
    %165 = arith.addf %163, %164 : vector<16x128xf32>
    %cst_42 = arith.constant 0.000000e+00 : f32
    %166 = vector.broadcast %cst_42 : f32 to vector<16x128xf32>
    %167 = arith.maximumf %165, %166 : vector<16x128xf32>
    %168 = arith.mulf %156, %167 : vector<16x128xf32>
    %169 = vector.extract_strided_slice %41 {offsets = [0, 2], sizes = [16, 1], strides = [1, 1]} : vector<16x3xi1> to vector<16x1xi1>
    %cst_43 = arith.constant 0.000000e+00 : f32
    %170 = vector.shape_cast %169 : vector<16x1xi1> to vector<16x1xi1>
    %171 = vector.broadcast %170 : vector<16x1xi1> to vector<16x128xi1>
    %172 = vector.broadcast %cst_43 : f32 to vector<16x128xf32>
    %173 = arith.select %171, %172, %168 : vector<16x128xi1>, vector<16x128xf32>
    %174 = vector.extract_strided_slice %36 {offsets = [0, 2], sizes = [16, 1], strides = [1, 1]} : vector<16x3xf32> to vector<16x1xf32>
    %175 = vector.broadcast %174 : vector<16x1xf32> to vector<16x128xf32>
    %176 = arith.addf %14, %175 : vector<16x128xf32>
    %177 = arith.subf %176, %173 : vector<16x128xf32>
    %178 = arith.mulf %173, %125 : vector<16x128xf32>
    %179 = arith.mulf %124, %177 : vector<16x128xf32>
    %180 = arith.cmpf ogt, %178, %179 : vector<16x128xf32>
    %181 = arith.select %180, %173, %124 : vector<16x128xi1>, vector<16x128xf32>
    %182 = arith.select %180, %177, %125 : vector<16x128xi1>, vector<16x128xf32>
    %183 = vector.extract_strided_slice %21 {offsets = [0, 2], sizes = [16, 1], strides = [1, 1]} : vector<16x3xf32> to vector<16x1xf32>
    %184 = vector.shape_cast %183 : vector<16x1xf32> to vector<16x1xf32>
    %185 = vector.broadcast %184 : vector<16x1xf32> to vector<16x128xf32>
    %186 = arith.select %180, %185, %129 : vector<16x128xi1>, vector<16x128xf32>
    %187 = vector.extract_strided_slice %23 {offsets = [0, 2], sizes = [16, 1], strides = [1, 1]} : vector<16x3xf32> to vector<16x1xf32>
    %188 = vector.shape_cast %187 : vector<16x1xf32> to vector<16x1xf32>
    %189 = vector.broadcast %188 : vector<16x1xf32> to vector<16x128xf32>
    %190 = arith.select %180, %189, %133 : vector<16x128xi1>, vector<16x128xf32>
    %191 = vector.extract_strided_slice %25 {offsets = [0, 2], sizes = [16, 1], strides = [1, 1]} : vector<16x3xf32> to vector<16x1xf32>
    %192 = vector.shape_cast %191 : vector<16x1xf32> to vector<16x1xf32>
    %193 = vector.broadcast %192 : vector<16x1xf32> to vector<16x128xf32>
    %194 = arith.select %180, %193, %137 : vector<16x128xi1>, vector<16x128xf32>
    %195 = vector.extract_strided_slice %27 {offsets = [0, 2], sizes = [16, 1], strides = [1, 1]} : vector<16x3xf32> to vector<16x1xf32>
    %196 = vector.shape_cast %195 : vector<16x1xf32> to vector<16x1xf32>
    %197 = vector.broadcast %196 : vector<16x1xf32> to vector<16x128xf32>
    %198 = arith.select %180, %197, %141 : vector<16x128xi1>, vector<16x128xf32>
    %199 = vector.extract_strided_slice %29 {offsets = [0, 2], sizes = [16, 1], strides = [1, 1]} : vector<16x3xf32> to vector<16x1xf32>
    %200 = vector.shape_cast %199 : vector<16x1xf32> to vector<16x1xf32>
    %201 = vector.broadcast %200 : vector<16x1xf32> to vector<16x128xf32>
    %202 = arith.select %180, %201, %145 : vector<16x128xi1>, vector<16x128xf32>
    %203 = tpu.reciprocal %182 : vector<16x128xf32> -> vector<16x128xf32>
    %204 = arith.mulf %181, %203 : vector<16x128xf32>
    %cst_44 = arith.constant -1.000000e+00 : f32
    %205 = vector.broadcast %cst_44 : f32 to vector<16x128xf32>
    %206 = arith.select %19, %205, %204 : vector<16x128xi1>, vector<16x128xf32>
    %c0_45 = arith.constant 0 : index
    %c0_46 = arith.constant 0 : index
    %c0_47 = arith.constant 0 : index
    %207 = vector.load %arg3[%c0_45, %c0_46, %c0_47] : memref<10x16x128xf32, #tpu.memory_space<vmem>>, vector<1x16x128xf32>
    %208 = vector.shape_cast %207 : vector<1x16x128xf32> to vector<16x128xf32>
    %209 = vector.shape_cast %1 : vector<16x128xf32> to vector<1x16x128xf32>
    tpu.vector_store %arg3[%c0_45, %c0_46, %c0_47], %209 {strides = array<i32>} : memref<10x16x128xf32, #tpu.memory_space<vmem>>, vector<1x16x128xf32>,
    %c1_48 = arith.constant 1 : index
    %c0_49 = arith.constant 0 : index
    %c0_50 = arith.constant 0 : index
    %210 = vector.load %arg3[%c1_48, %c0_49, %c0_50] : memref<10x16x128xf32, #tpu.memory_space<vmem>>, vector<1x16x128xf32>
    %211 = vector.shape_cast %210 : vector<1x16x128xf32> to vector<16x128xf32>
    %212 = vector.shape_cast %3 : vector<16x128xf32> to vector<1x16x128xf32>
    tpu.vector_store %arg3[%c1_48, %c0_49, %c0_50], %212 {strides = array<i32>} : memref<10x16x128xf32, #tpu.memory_space<vmem>>, vector<1x16x128xf32>,
    %c2_51 = arith.constant 2 : index
    %c0_52 = arith.constant 0 : index
    %c0_53 = arith.constant 0 : index
    %213 = vector.load %arg3[%c2_51, %c0_52, %c0_53] : memref<10x16x128xf32, #tpu.memory_space<vmem>>, vector<1x16x128xf32>
    %214 = vector.shape_cast %213 : vector<1x16x128xf32> to vector<16x128xf32>
    %215 = vector.shape_cast %5 : vector<16x128xf32> to vector<1x16x128xf32>
    tpu.vector_store %arg3[%c2_51, %c0_52, %c0_53], %215 {strides = array<i32>} : memref<10x16x128xf32, #tpu.memory_space<vmem>>, vector<1x16x128xf32>,
    %c3_54 = arith.constant 3 : index
    %c0_55 = arith.constant 0 : index
    %c0_56 = arith.constant 0 : index
    %216 = vector.load %arg3[%c3_54, %c0_55, %c0_56] : memref<10x16x128xf32, #tpu.memory_space<vmem>>, vector<1x16x128xf32>
    %217 = vector.shape_cast %216 : vector<1x16x128xf32> to vector<16x128xf32>
    %218 = vector.shape_cast %7 : vector<16x128xf32> to vector<1x16x128xf32>
    tpu.vector_store %arg3[%c3_54, %c0_55, %c0_56], %218 {strides = array<i32>} : memref<10x16x128xf32, #tpu.memory_space<vmem>>, vector<1x16x128xf32>,
    %c4_57 = arith.constant 4 : index
    %c0_58 = arith.constant 0 : index
    %c0_59 = arith.constant 0 : index
    %219 = vector.load %arg3[%c4_57, %c0_58, %c0_59] : memref<10x16x128xf32, #tpu.memory_space<vmem>>, vector<1x16x128xf32>
    %220 = vector.shape_cast %219 : vector<1x16x128xf32> to vector<16x128xf32>
    %221 = vector.shape_cast %186 : vector<16x128xf32> to vector<1x16x128xf32>
    tpu.vector_store %arg3[%c4_57, %c0_58, %c0_59], %221 {strides = array<i32>} : memref<10x16x128xf32, #tpu.memory_space<vmem>>, vector<1x16x128xf32>,
    %c5 = arith.constant 5 : index
    %c0_60 = arith.constant 0 : index
    %c0_61 = arith.constant 0 : index
    %222 = vector.load %arg3[%c5, %c0_60, %c0_61] : memref<10x16x128xf32, #tpu.memory_space<vmem>>, vector<1x16x128xf32>
    %223 = vector.shape_cast %222 : vector<1x16x128xf32> to vector<16x128xf32>
    %224 = vector.shape_cast %190 : vector<16x128xf32> to vector<1x16x128xf32>
    tpu.vector_store %arg3[%c5, %c0_60, %c0_61], %224 {strides = array<i32>} : memref<10x16x128xf32, #tpu.memory_space<vmem>>, vector<1x16x128xf32>,
    %c6 = arith.constant 6 : index
    %c0_62 = arith.constant 0 : index
    %c0_63 = arith.constant 0 : index
    %225 = vector.load %arg3[%c6, %c0_62, %c0_63] : memref<10x16x128xf32, #tpu.memory_space<vmem>>, vector<1x16x128xf32>
    %226 = vector.shape_cast %225 : vector<1x16x128xf32> to vector<16x128xf32>
    %227 = vector.shape_cast %194 : vector<16x128xf32> to vector<1x16x128xf32>
    tpu.vector_store %arg3[%c6, %c0_62, %c0_63], %227 {strides = array<i32>} : memref<10x16x128xf32, #tpu.memory_space<vmem>>, vector<1x16x128xf32>,
    %c7 = arith.constant 7 : index
    %c0_64 = arith.constant 0 : index
    %c0_65 = arith.constant 0 : index
    %228 = vector.load %arg3[%c7, %c0_64, %c0_65] : memref<10x16x128xf32, #tpu.memory_space<vmem>>, vector<1x16x128xf32>
    %229 = vector.shape_cast %228 : vector<1x16x128xf32> to vector<16x128xf32>
    %230 = vector.shape_cast %198 : vector<16x128xf32> to vector<1x16x128xf32>
    tpu.vector_store %arg3[%c7, %c0_64, %c0_65], %230 {strides = array<i32>} : memref<10x16x128xf32, #tpu.memory_space<vmem>>, vector<1x16x128xf32>,
    %c8 = arith.constant 8 : index
    %c0_66 = arith.constant 0 : index
    %c0_67 = arith.constant 0 : index
    %231 = vector.load %arg3[%c8, %c0_66, %c0_67] : memref<10x16x128xf32, #tpu.memory_space<vmem>>, vector<1x16x128xf32>
    %232 = vector.shape_cast %231 : vector<1x16x128xf32> to vector<16x128xf32>
    %233 = vector.shape_cast %202 : vector<16x128xf32> to vector<1x16x128xf32>
    tpu.vector_store %arg3[%c8, %c0_66, %c0_67], %233 {strides = array<i32>} : memref<10x16x128xf32, #tpu.memory_space<vmem>>, vector<1x16x128xf32>,
    %c9 = arith.constant 9 : index
    %c0_68 = arith.constant 0 : index
    %c0_69 = arith.constant 0 : index
    %234 = vector.load %arg3[%c9, %c0_68, %c0_69] : memref<10x16x128xf32, #tpu.memory_space<vmem>>, vector<1x16x128xf32>
    %235 = vector.shape_cast %234 : vector<1x16x128xf32> to vector<16x128xf32>
    %236 = vector.shape_cast %206 : vector<16x128xf32> to vector<1x16x128xf32>
    tpu.vector_store %arg3[%c9, %c0_68, %c0_69], %236 {strides = array<i32>} : memref<10x16x128xf32, #tpu.memory_space<vmem>>, vector<1x16x128xf32>,
    return
  }
  func.func @transform_0(%arg0: i32) -> (i32, i32, i32) {
    %c0_i32 = arith.constant 0 : i32
    %c0_i32_0 = arith.constant 0 : i32
    %c0_i32_1 = arith.constant 0 : i32
    %c0_i32_2 = arith.constant 0 : i32
    return %c0_i32, %c0_i32_0, %c0_i32_1 : i32, i32, i32
  }
  func.func @transform_1(%arg0: i32) -> (i32, i32, i32) {
    %c0_i32 = arith.constant 0 : i32
    %c0_i32_0 = arith.constant 0 : i32
    %c0_i32_1 = arith.constant 0 : i32
    %c0_i32_2 = arith.constant 0 : i32
    return %c0_i32, %c0_i32_0, %c0_i32_1 : i32, i32, i32
  }
  func.func @transform_2(%arg0: i32) -> (i32, i32, i32) {
    %c0_i32 = arith.constant 0 : i32
    %c0_i32_0 = arith.constant 0 : i32
    %c0_i32_1 = arith.constant 0 : i32
    %c0_i32_2 = arith.constant 0 : i32
    return %c0_i32, %c0_i32_0, %c0_i32_1 : i32, i32, i32
  }
}

module attributes {stable_mosaic.version = 11 : i64} {
  func.func @_targets_kernel(%arg0: i32, %arg1: memref<9x8x128xf32, #tpu.memory_space<vmem>>, %arg2: memref<12x8x128xf32, #tpu.memory_space<vmem>>) attributes {dimension_semantics = [#tpu.dimension_semantics<arbitrary>], iteration_bounds = array<i64: 1>, scalar_prefetch = 0 : i64, scratch_operands = 0 : i64, tpu.core_type = #tpu.core_type<tc>, window_params = [{pipeline_mode = #tpu.pipeline_mode<synchronous>, transform_indices = @transform_0, window_bounds = array<i64: 9, 8, 128>}, {pipeline_mode = #tpu.pipeline_mode<synchronous>, transform_indices = @transform_1, window_bounds = array<i64: 12, 8, 128>}]} {
    %c0 = arith.constant 0 : index
    %c0_0 = arith.constant 0 : index
    %c0_1 = arith.constant 0 : index
    %0 = vector.load %arg1[%c0, %c0_0, %c0_1] : memref<9x8x128xf32, #tpu.memory_space<vmem>>, vector<1x8x128xf32>
    %1 = vector.shape_cast %0 : vector<1x8x128xf32> to vector<8x128xf32>
    %c1 = arith.constant 1 : index
    %c0_2 = arith.constant 0 : index
    %c0_3 = arith.constant 0 : index
    %2 = vector.load %arg1[%c1, %c0_2, %c0_3] : memref<9x8x128xf32, #tpu.memory_space<vmem>>, vector<1x8x128xf32>
    %3 = vector.shape_cast %2 : vector<1x8x128xf32> to vector<8x128xf32>
    %c2 = arith.constant 2 : index
    %c0_4 = arith.constant 0 : index
    %c0_5 = arith.constant 0 : index
    %4 = vector.load %arg1[%c2, %c0_4, %c0_5] : memref<9x8x128xf32, #tpu.memory_space<vmem>>, vector<1x8x128xf32>
    %5 = vector.shape_cast %4 : vector<1x8x128xf32> to vector<8x128xf32>
    %c3 = arith.constant 3 : index
    %c0_6 = arith.constant 0 : index
    %c0_7 = arith.constant 0 : index
    %6 = vector.load %arg1[%c3, %c0_6, %c0_7] : memref<9x8x128xf32, #tpu.memory_space<vmem>>, vector<1x8x128xf32>
    %7 = vector.shape_cast %6 : vector<1x8x128xf32> to vector<8x128xf32>
    %c4 = arith.constant 4 : index
    %c0_8 = arith.constant 0 : index
    %c0_9 = arith.constant 0 : index
    %8 = vector.load %arg1[%c4, %c0_8, %c0_9] : memref<9x8x128xf32, #tpu.memory_space<vmem>>, vector<1x8x128xf32>
    %9 = vector.shape_cast %8 : vector<1x8x128xf32> to vector<8x128xf32>
    %c5 = arith.constant 5 : index
    %c0_10 = arith.constant 0 : index
    %c0_11 = arith.constant 0 : index
    %10 = vector.load %arg1[%c5, %c0_10, %c0_11] : memref<9x8x128xf32, #tpu.memory_space<vmem>>, vector<1x8x128xf32>
    %11 = vector.shape_cast %10 : vector<1x8x128xf32> to vector<8x128xf32>
    %c6 = arith.constant 6 : index
    %c0_12 = arith.constant 0 : index
    %c0_13 = arith.constant 0 : index
    %12 = vector.load %arg1[%c6, %c0_12, %c0_13] : memref<9x8x128xf32, #tpu.memory_space<vmem>>, vector<1x8x128xf32>
    %13 = vector.shape_cast %12 : vector<1x8x128xf32> to vector<8x128xf32>
    %c7 = arith.constant 7 : index
    %c0_14 = arith.constant 0 : index
    %c0_15 = arith.constant 0 : index
    %14 = vector.load %arg1[%c7, %c0_14, %c0_15] : memref<9x8x128xf32, #tpu.memory_space<vmem>>, vector<1x8x128xf32>
    %15 = vector.shape_cast %14 : vector<1x8x128xf32> to vector<8x128xf32>
    %c8 = arith.constant 8 : index
    %c0_16 = arith.constant 0 : index
    %c0_17 = arith.constant 0 : index
    %16 = vector.load %arg1[%c8, %c0_16, %c0_17] : memref<9x8x128xf32, #tpu.memory_space<vmem>>, vector<1x8x128xf32>
    %17 = vector.shape_cast %16 : vector<1x8x128xf32> to vector<8x128xf32>
    %18 = arith.subf %5, %1 : vector<8x128xf32>
    %cst = arith.constant 1.000000e+00 : f32
    %19 = vector.broadcast %cst : f32 to vector<8x128xf32>
    %20 = arith.addf %18, %19 : vector<8x128xf32>
    %21 = arith.subf %7, %3 : vector<8x128xf32>
    %cst_18 = arith.constant 1.000000e+00 : f32
    %22 = vector.broadcast %cst_18 : f32 to vector<8x128xf32>
    %23 = arith.addf %21, %22 : vector<8x128xf32>
    %24 = arith.subf %13, %9 : vector<8x128xf32>
    %cst_19 = arith.constant 1.000000e+00 : f32
    %25 = vector.broadcast %cst_19 : f32 to vector<8x128xf32>
    %26 = arith.addf %24, %25 : vector<8x128xf32>
    %27 = arith.subf %15, %11 : vector<8x128xf32>
    %cst_20 = arith.constant 1.000000e+00 : f32
    %28 = vector.broadcast %cst_20 : f32 to vector<8x128xf32>
    %29 = arith.addf %27, %28 : vector<8x128xf32>
    %30 = tpu.reciprocal %20 {approx = true} : vector<8x128xf32> -> vector<8x128xf32>
    %31 = tpu.reciprocal %23 {approx = true} : vector<8x128xf32> -> vector<8x128xf32>
    %cst_21 = arith.constant 5.000000e-01 : f32
    %32 = vector.broadcast %cst_21 : f32 to vector<8x128xf32>
    %33 = arith.mulf %32, %20 : vector<8x128xf32>
    %34 = arith.addf %1, %33 : vector<8x128xf32>
    %cst_22 = arith.constant 5.000000e-01 : f32
    %35 = vector.broadcast %cst_22 : f32 to vector<8x128xf32>
    %36 = arith.mulf %35, %23 : vector<8x128xf32>
    %37 = arith.addf %3, %36 : vector<8x128xf32>
    %cst_23 = arith.constant 5.000000e-01 : f32
    %38 = vector.broadcast %cst_23 : f32 to vector<8x128xf32>
    %39 = arith.mulf %38, %26 : vector<8x128xf32>
    %40 = arith.addf %9, %39 : vector<8x128xf32>
    %cst_24 = arith.constant 5.000000e-01 : f32
    %41 = vector.broadcast %cst_24 : f32 to vector<8x128xf32>
    %42 = arith.mulf %41, %29 : vector<8x128xf32>
    %43 = arith.addf %11, %42 : vector<8x128xf32>
    %44 = arith.subf %40, %34 : vector<8x128xf32>
    %45 = arith.mulf %44, %30 : vector<8x128xf32>
    %46 = arith.subf %43, %37 : vector<8x128xf32>
    %47 = arith.mulf %46, %31 : vector<8x128xf32>
    %48 = arith.mulf %26, %30 : vector<8x128xf32>
    %49 = math.log %48 : vector<8x128xf32>
    %50 = arith.mulf %29, %31 : vector<8x128xf32>
    %51 = math.log %50 : vector<8x128xf32>
    %cst_25 = arith.constant 0.000000e+00 : f32
    %52 = vector.broadcast %cst_25 : f32 to vector<8x128xf32>
    %53 = arith.subf %45, %52 : vector<8x128xf32>
    %cst_26 = arith.constant 1.000000e+01 : f32
    %54 = vector.broadcast %cst_26 : f32 to vector<8x128xf32>
    %55 = arith.mulf %53, %54 : vector<8x128xf32>
    %cst_27 = arith.constant 0.000000e+00 : f32
    %56 = vector.broadcast %cst_27 : f32 to vector<8x128xf32>
    %57 = arith.subf %47, %56 : vector<8x128xf32>
    %cst_28 = arith.constant 1.000000e+01 : f32
    %58 = vector.broadcast %cst_28 : f32 to vector<8x128xf32>
    %59 = arith.mulf %57, %58 : vector<8x128xf32>
    %cst_29 = arith.constant 0.000000e+00 : f32
    %60 = vector.broadcast %cst_29 : f32 to vector<8x128xf32>
    %61 = arith.subf %49, %60 : vector<8x128xf32>
    %cst_30 = arith.constant 5.000000e+00 : f32
    %62 = vector.broadcast %cst_30 : f32 to vector<8x128xf32>
    %63 = arith.mulf %61, %62 : vector<8x128xf32>
    %cst_31 = arith.constant 0.000000e+00 : f32
    %64 = vector.broadcast %cst_31 : f32 to vector<8x128xf32>
    %65 = arith.subf %51, %64 : vector<8x128xf32>
    %cst_32 = arith.constant 5.000000e+00 : f32
    %66 = vector.broadcast %cst_32 : f32 to vector<8x128xf32>
    %67 = arith.mulf %65, %66 : vector<8x128xf32>
    %cst_33 = arith.constant 0.000000e+00 : f32
    %68 = vector.broadcast %cst_33 : f32 to vector<8x128xf32>
    %69 = arith.cmpf ogt, %17, %68 : vector<8x128xf32>
    %70 = arith.extui %69 : vector<8x128xi1> to vector<8x128xi32>
    %71 = arith.sitofp %70 : vector<8x128xi32> to vector<8x128xf32>
    %72 = arith.mulf %55, %71 : vector<8x128xf32>
    %c0_34 = arith.constant 0 : index
    %c0_35 = arith.constant 0 : index
    %c0_36 = arith.constant 0 : index
    %73 = vector.load %arg2[%c0_34, %c0_35, %c0_36] : memref<12x8x128xf32, #tpu.memory_space<vmem>>, vector<1x8x128xf32>
    %74 = vector.shape_cast %73 : vector<1x8x128xf32> to vector<8x128xf32>
    %75 = vector.shape_cast %72 : vector<8x128xf32> to vector<1x8x128xf32>
    tpu.vector_store %arg2[%c0_34, %c0_35, %c0_36], %75 {strides = array<i32>} : memref<12x8x128xf32, #tpu.memory_space<vmem>>, vector<1x8x128xf32>,
    %cst_37 = arith.constant 1.000000e+00 : f32
    %76 = vector.broadcast %cst_37 : f32 to vector<8x128xf32>
    %77 = arith.mulf %76, %71 : vector<8x128xf32>
    %c4_38 = arith.constant 4 : index
    %c0_39 = arith.constant 0 : index
    %c0_40 = arith.constant 0 : index
    %78 = vector.load %arg2[%c4_38, %c0_39, %c0_40] : memref<12x8x128xf32, #tpu.memory_space<vmem>>, vector<1x8x128xf32>
    %79 = vector.shape_cast %78 : vector<1x8x128xf32> to vector<8x128xf32>
    %80 = vector.shape_cast %77 : vector<8x128xf32> to vector<1x8x128xf32>
    tpu.vector_store %arg2[%c4_38, %c0_39, %c0_40], %80 {strides = array<i32>} : memref<12x8x128xf32, #tpu.memory_space<vmem>>, vector<1x8x128xf32>,
    %cst_41 = arith.constant 0.000000e+00 : f32
    %81 = vector.broadcast %cst_41 : f32 to vector<8x128xf32>
    %82 = arith.cmpf ogt, %77, %81 : vector<8x128xf32>
    %cst_42 = arith.constant 1.000000e+00 : f32
    %cst_43 = arith.constant 0.000000e+00 : f32
    %83 = vector.broadcast %cst_42 : f32 to vector<8x128xf32>
    %84 = vector.broadcast %cst_43 : f32 to vector<8x128xf32>
    %85 = arith.select %82, %83, %84 : vector<8x128xi1>, vector<8x128xf32>
    %c8_44 = arith.constant 8 : index
    %c0_45 = arith.constant 0 : index
    %c0_46 = arith.constant 0 : index
    %86 = vector.load %arg2[%c8_44, %c0_45, %c0_46] : memref<12x8x128xf32, #tpu.memory_space<vmem>>, vector<1x8x128xf32>
    %87 = vector.shape_cast %86 : vector<1x8x128xf32> to vector<8x128xf32>
    %88 = vector.shape_cast %85 : vector<8x128xf32> to vector<1x8x128xf32>
    tpu.vector_store %arg2[%c8_44, %c0_45, %c0_46], %88 {strides = array<i32>} : memref<12x8x128xf32, #tpu.memory_space<vmem>>, vector<1x8x128xf32>,
    %89 = arith.mulf %59, %71 : vector<8x128xf32>
    %c1_47 = arith.constant 1 : index
    %c0_48 = arith.constant 0 : index
    %c0_49 = arith.constant 0 : index
    %90 = vector.load %arg2[%c1_47, %c0_48, %c0_49] : memref<12x8x128xf32, #tpu.memory_space<vmem>>, vector<1x8x128xf32>
    %91 = vector.shape_cast %90 : vector<1x8x128xf32> to vector<8x128xf32>
    %92 = vector.shape_cast %89 : vector<8x128xf32> to vector<1x8x128xf32>
    tpu.vector_store %arg2[%c1_47, %c0_48, %c0_49], %92 {strides = array<i32>} : memref<12x8x128xf32, #tpu.memory_space<vmem>>, vector<1x8x128xf32>,
    %cst_50 = arith.constant 1.000000e+00 : f32
    %93 = vector.broadcast %cst_50 : f32 to vector<8x128xf32>
    %94 = arith.mulf %93, %71 : vector<8x128xf32>
    %c5_51 = arith.constant 5 : index
    %c0_52 = arith.constant 0 : index
    %c0_53 = arith.constant 0 : index
    %95 = vector.load %arg2[%c5_51, %c0_52, %c0_53] : memref<12x8x128xf32, #tpu.memory_space<vmem>>, vector<1x8x128xf32>
    %96 = vector.shape_cast %95 : vector<1x8x128xf32> to vector<8x128xf32>
    %97 = vector.shape_cast %94 : vector<8x128xf32> to vector<1x8x128xf32>
    tpu.vector_store %arg2[%c5_51, %c0_52, %c0_53], %97 {strides = array<i32>} : memref<12x8x128xf32, #tpu.memory_space<vmem>>, vector<1x8x128xf32>,
    %cst_54 = arith.constant 0.000000e+00 : f32
    %98 = vector.broadcast %cst_54 : f32 to vector<8x128xf32>
    %99 = arith.cmpf ogt, %94, %98 : vector<8x128xf32>
    %cst_55 = arith.constant 1.000000e+00 : f32
    %cst_56 = arith.constant 0.000000e+00 : f32
    %100 = vector.broadcast %cst_55 : f32 to vector<8x128xf32>
    %101 = vector.broadcast %cst_56 : f32 to vector<8x128xf32>
    %102 = arith.select %99, %100, %101 : vector<8x128xi1>, vector<8x128xf32>
    %c9 = arith.constant 9 : index
    %c0_57 = arith.constant 0 : index
    %c0_58 = arith.constant 0 : index
    %103 = vector.load %arg2[%c9, %c0_57, %c0_58] : memref<12x8x128xf32, #tpu.memory_space<vmem>>, vector<1x8x128xf32>
    %104 = vector.shape_cast %103 : vector<1x8x128xf32> to vector<8x128xf32>
    %105 = vector.shape_cast %102 : vector<8x128xf32> to vector<1x8x128xf32>
    tpu.vector_store %arg2[%c9, %c0_57, %c0_58], %105 {strides = array<i32>} : memref<12x8x128xf32, #tpu.memory_space<vmem>>, vector<1x8x128xf32>,
    %106 = arith.mulf %63, %71 : vector<8x128xf32>
    %c2_59 = arith.constant 2 : index
    %c0_60 = arith.constant 0 : index
    %c0_61 = arith.constant 0 : index
    %107 = vector.load %arg2[%c2_59, %c0_60, %c0_61] : memref<12x8x128xf32, #tpu.memory_space<vmem>>, vector<1x8x128xf32>
    %108 = vector.shape_cast %107 : vector<1x8x128xf32> to vector<8x128xf32>
    %109 = vector.shape_cast %106 : vector<8x128xf32> to vector<1x8x128xf32>
    tpu.vector_store %arg2[%c2_59, %c0_60, %c0_61], %109 {strides = array<i32>} : memref<12x8x128xf32, #tpu.memory_space<vmem>>, vector<1x8x128xf32>,
    %cst_62 = arith.constant 1.000000e+00 : f32
    %110 = vector.broadcast %cst_62 : f32 to vector<8x128xf32>
    %111 = arith.mulf %110, %71 : vector<8x128xf32>
    %c6_63 = arith.constant 6 : index
    %c0_64 = arith.constant 0 : index
    %c0_65 = arith.constant 0 : index
    %112 = vector.load %arg2[%c6_63, %c0_64, %c0_65] : memref<12x8x128xf32, #tpu.memory_space<vmem>>, vector<1x8x128xf32>
    %113 = vector.shape_cast %112 : vector<1x8x128xf32> to vector<8x128xf32>
    %114 = vector.shape_cast %111 : vector<8x128xf32> to vector<1x8x128xf32>
    tpu.vector_store %arg2[%c6_63, %c0_64, %c0_65], %114 {strides = array<i32>} : memref<12x8x128xf32, #tpu.memory_space<vmem>>, vector<1x8x128xf32>,
    %cst_66 = arith.constant 0.000000e+00 : f32
    %115 = vector.broadcast %cst_66 : f32 to vector<8x128xf32>
    %116 = arith.cmpf ogt, %111, %115 : vector<8x128xf32>
    %cst_67 = arith.constant 1.000000e+00 : f32
    %cst_68 = arith.constant 0.000000e+00 : f32
    %117 = vector.broadcast %cst_67 : f32 to vector<8x128xf32>
    %118 = vector.broadcast %cst_68 : f32 to vector<8x128xf32>
    %119 = arith.select %116, %117, %118 : vector<8x128xi1>, vector<8x128xf32>
    %c10 = arith.constant 10 : index
    %c0_69 = arith.constant 0 : index
    %c0_70 = arith.constant 0 : index
    %120 = vector.load %arg2[%c10, %c0_69, %c0_70] : memref<12x8x128xf32, #tpu.memory_space<vmem>>, vector<1x8x128xf32>
    %121 = vector.shape_cast %120 : vector<1x8x128xf32> to vector<8x128xf32>
    %122 = vector.shape_cast %119 : vector<8x128xf32> to vector<1x8x128xf32>
    tpu.vector_store %arg2[%c10, %c0_69, %c0_70], %122 {strides = array<i32>} : memref<12x8x128xf32, #tpu.memory_space<vmem>>, vector<1x8x128xf32>,
    %123 = arith.mulf %67, %71 : vector<8x128xf32>
    %c3_71 = arith.constant 3 : index
    %c0_72 = arith.constant 0 : index
    %c0_73 = arith.constant 0 : index
    %124 = vector.load %arg2[%c3_71, %c0_72, %c0_73] : memref<12x8x128xf32, #tpu.memory_space<vmem>>, vector<1x8x128xf32>
    %125 = vector.shape_cast %124 : vector<1x8x128xf32> to vector<8x128xf32>
    %126 = vector.shape_cast %123 : vector<8x128xf32> to vector<1x8x128xf32>
    tpu.vector_store %arg2[%c3_71, %c0_72, %c0_73], %126 {strides = array<i32>} : memref<12x8x128xf32, #tpu.memory_space<vmem>>, vector<1x8x128xf32>,
    %cst_74 = arith.constant 1.000000e+00 : f32
    %127 = vector.broadcast %cst_74 : f32 to vector<8x128xf32>
    %128 = arith.mulf %127, %71 : vector<8x128xf32>
    %c7_75 = arith.constant 7 : index
    %c0_76 = arith.constant 0 : index
    %c0_77 = arith.constant 0 : index
    %129 = vector.load %arg2[%c7_75, %c0_76, %c0_77] : memref<12x8x128xf32, #tpu.memory_space<vmem>>, vector<1x8x128xf32>
    %130 = vector.shape_cast %129 : vector<1x8x128xf32> to vector<8x128xf32>
    %131 = vector.shape_cast %128 : vector<8x128xf32> to vector<1x8x128xf32>
    tpu.vector_store %arg2[%c7_75, %c0_76, %c0_77], %131 {strides = array<i32>} : memref<12x8x128xf32, #tpu.memory_space<vmem>>, vector<1x8x128xf32>,
    %cst_78 = arith.constant 0.000000e+00 : f32
    %132 = vector.broadcast %cst_78 : f32 to vector<8x128xf32>
    %133 = arith.cmpf ogt, %128, %132 : vector<8x128xf32>
    %cst_79 = arith.constant 1.000000e+00 : f32
    %cst_80 = arith.constant 0.000000e+00 : f32
    %134 = vector.broadcast %cst_79 : f32 to vector<8x128xf32>
    %135 = vector.broadcast %cst_80 : f32 to vector<8x128xf32>
    %136 = arith.select %133, %134, %135 : vector<8x128xi1>, vector<8x128xf32>
    %c11 = arith.constant 11 : index
    %c0_81 = arith.constant 0 : index
    %c0_82 = arith.constant 0 : index
    %137 = vector.load %arg2[%c11, %c0_81, %c0_82] : memref<12x8x128xf32, #tpu.memory_space<vmem>>, vector<1x8x128xf32>
    %138 = vector.shape_cast %137 : vector<1x8x128xf32> to vector<8x128xf32>
    %139 = vector.shape_cast %136 : vector<8x128xf32> to vector<1x8x128xf32>
    tpu.vector_store %arg2[%c11, %c0_81, %c0_82], %139 {strides = array<i32>} : memref<12x8x128xf32, #tpu.memory_space<vmem>>, vector<1x8x128xf32>,
    return
  }
  func.func @transform_0(%arg0: i32) -> (i32, i32, i32) {
    %c0_i32 = arith.constant 0 : i32
    %c0_i32_0 = arith.constant 0 : i32
    %c0_i32_1 = arith.constant 0 : i32
    %c0_i32_2 = arith.constant 0 : i32
    return %c0_i32, %c0_i32_0, %c0_i32_1 : i32, i32, i32
  }
  func.func @transform_1(%arg0: i32) -> (i32, i32, i32) {
    %c0_i32 = arith.constant 0 : i32
    %c0_i32_0 = arith.constant 0 : i32
    %c0_i32_1 = arith.constant 0 : i32
    %c0_i32_2 = arith.constant 0 : i32
    return %c0_i32, %c0_i32_0, %c0_i32_1 : i32, i32, i32
  }
}

</mosaic_0001>

<llo_original>
// kernel: regression_target_forward.2
$region0: #{regression_target_forward.2}
  #allocation0 [shape = 'u32[]', space=smem, size = 0x4, offset = 0x4, fixed_abs, tag = 'smem constant byte address 0x4 - core index']
  #allocation1 [shape = 'u32[72,128]{1,0:T(1,128)}', space=vmem, size = 0x9000, scoped, tag = 'internal scratch']
  %s0 = inlined_call_operand.vmem [shape: f32[4,16,128], index: 0, kind: input, shape index: {}]
  %s1 = inlined_call_operand.vmem [shape: f32[5,16,3], index: 1, kind: input, shape index: {}]
  %s2 = inlined_call_operand.vmem [shape: f32[10,16,128], index: 2, kind: output, shape index: {}]
  %s3 = sld [smem:[#allocation0]]
  $region18: #{regression_target_forward.2} parent=0
    _
  %s5 = ssub.s32 1, %s3
  %s6 = scalar_select 0, %s5, %s3
  // Predicated region
  $region2: #{regression_target_forward.2} parent=0 // pred_check
    _
  $region3: #{regression_target_forward.2} parent=0 // pred_check_branch
    %8 = sbr.rel (0) target = $region5
  $region4: #{regression_target_forward.2} parent=0 // pred_region
    _
  $region5: #{regression_target_forward.2} parent=0 // pred_fallthru
    _
  // Predicated region
  $region6: #{regression_target_forward.2} parent=0 // pred_check
    _
  $region7: #{regression_target_forward.2} parent=0 // pred_check_branch
    %10 = sbr.rel (0) target = $region9
  $region8: #{regression_target_forward.2} parent=0 // pred_region
    _
  $region9: #{regression_target_forward.2} parent=0 // pred_fallthru
    _
  %v11 = vld [vmem:[%s0] sm:$0xff]
  %v12 = vld [vmem:[%s0 + $0x8] sm:$0xff]
  %s13 = scalar_lea.vmem %s0, 16
  %v14 = vld [vmem:[%s13] sm:$0xff]
  %v15 = vld [vmem:[%s13 + $0x8] sm:$0xff]
  %s16 = scalar_lea.vmem %s0, 32
  %v17 = vld [vmem:[%s16] sm:$0xff]
  %v18 = vld [vmem:[%s16 + $0x8] sm:$0xff]
  %s19 = scalar_lea.vmem %s0, 48
  %v20 = vld [vmem:[%s19] sm:$0xff]
  %v21 = vld [vmem:[%s19 + $0x8] sm:$0xff]
  %v22 = vsub.f32 %v17, %v11
  %v23 = vsub.f32 %v18, %v12
  %v24 = vadd.f32 %v22, 1.0
  %v25 = vadd.f32 %v23, 1.0
  %v26 = vsub.f32 %v20, %v14
  %v27 = vsub.f32 %v21, %v15
  %v28 = vadd.f32 %v26, 1.0
  %v29 = vadd.f32 %v27, 1.0
  %v30 = vmul.f32 %v24, %v28
  %v31 = vmul.f32 %v25, %v29
  %vm32 = vcmp.eq.f32.partialorder %v24, 1.0
  %vm33 = vcmp.eq.f32.partialorder %v25, 1.0
  %vm34 = vcmp.eq.f32.partialorder %v28, 1.0
  %vm35 = vcmp.eq.f32.partialorder %v29, 1.0
  %vm36 = vmand %vm32, %vm34
  %vm37 = vmand %vm33, %vm35
  %v38 = vld [vmem:[%s1] sm:$0xff]
  %v39 = vld [vmem:[%s1 + $0x8] sm:$0xff]
  %s40 = scalar_lea.vmem %s1, 16
  %v41 = vld [vmem:[%s40] sm:$0xff]
  %v42 = vld [vmem:[%s40 + $0x8] sm:$0xff]
  %s43 = scalar_lea.vmem %s1, 32
  %v44 = vld [vmem:[%s43] sm:$0xff]
  %v45 = vld [vmem:[%s43 + $0x8] sm:$0xff]
  %s46 = scalar_lea.vmem %s1, 48
  %v47 = vld [vmem:[%s46] sm:$0xff]
  %v48 = vld [vmem:[%s46 + $0x8] sm:$0xff]
  %s49 = scalar_lea.vmem %s1, 64
  %v50 = vld [vmem:[%s49] sm:$0xff]
  %v51 = vld [vmem:[%s49 + $0x8] sm:$0xff]
  %v52 = vsub.f32 %v44, %v38
  %v53 = vsub.f32 %v45, %v39
  %v54 = vadd.f32 %v52, 1.0
  %v55 = vadd.f32 %v53, 1.0
  %v56 = vsub.f32 %v47, %v41
  %v57 = vsub.f32 %v48, %v42
  %v58 = vadd.f32 %v56, 1.0
  %v59 = vadd.f32 %v57, 1.0
  %v60 = vmul.f32 %v54, %v58
  %v61 = vmul.f32 %v55, %v59
  %vm62 = vcmp.eq.f32.partialorder %v54, 1.0
  %vm63 = vcmp.eq.f32.partialorder %v55, 1.0
  %vm64 = vcmp.eq.f32.partialorder %v58, 1.0
  %vm65 = vcmp.eq.f32.partialorder %v59, 1.0
  %vm66 = vmand %vm62, %vm64
  %vm67 = vmand %vm63, %vm65
  %69 = vset.pattern.permute.xlu0 0
  %70 = vperm.xlu0 %69, %v44
  %v71 = vpop.permute.xlu0 %70
  %74 = vset.pattern.permute.xlu0 0
  %75 = vperm.xlu0 %74, %v45
  %v76 = vpop.permute.xlu0 %75
  %v78 = vmin.f32 %v17, %v71
  %v79 = vmin.f32 %v18, %v76
  %81 = vset.pattern.permute.xlu0 0
  %82 = vperm.xlu0 %81, %v38
  %v83 = vpop.permute.xlu0 %82
  %86 = vset.pattern.permute.xlu0 0
  %87 = vperm.xlu0 %86, %v39
  %v88 = vpop.permute.xlu0 %87
  %v90 = vmax.f32 %v11, %v83
  %v91 = vmax.f32 %v12, %v88
  %v92 = vsub.f32 %v78, %v90
  %v93 = vsub.f32 %v79, %v91
  %v94 = vadd.f32 %v92, 1.0
  %v95 = vadd.f32 %v93, 1.0
  %v96 = vmax.f32 %v94, 0.0
  %v97 = vmax.f32 %v95, 0.0
  %99 = vset.pattern.permute.xlu0 0
  %100 = vperm.xlu0 %99, %v47
  %v101 = vpop.permute.xlu0 %100
  %104 = vset.pattern.permute.xlu0 0
  %105 = vperm.xlu0 %104, %v48
  %v106 = vpop.permute.xlu0 %105
  %v108 = vmin.f32 %v20, %v101
  %v109 = vmin.f32 %v21, %v106
  %111 = vset.pattern.permute.xlu0 0
  %112 = vperm.xlu0 %111, %v41
  %v113 = vpop.permute.xlu0 %112
  %116 = vset.pattern.permute.xlu0 0
  %117 = vperm.xlu0 %116, %v42
  %v118 = vpop.permute.xlu0 %117
  %v120 = vmax.f32 %v14, %v113
  %v121 = vmax.f32 %v15, %v118
  %v122 = vsub.f32 %v108, %v120
  %v123 = vsub.f32 %v109, %v121
  %v124 = vadd.f32 %v122, 1.0
  %v125 = vadd.f32 %v123, 1.0
  %v126 = vmax.f32 %v124, 0.0
  %v127 = vmax.f32 %v125, 0.0
  %v128 = vmul.f32 %v96, %v126
  %v129 = vmul.f32 %v97, %v127
  %v130 = vsel %vm66, 1, 0
  %v131 = vsel %vm67, 1, 0
  %132 = vset.pattern.permute.xlu0 0
  %133 = vperm.xlu0 %132, %v130
  %v134 = vpop.permute.xlu0 %133
  %135 = vset.pattern.permute.xlu0 0
  %136 = vperm.xlu0 %135, %v131
  %v137 = vpop.permute.xlu0 %136
  %vm138 = vcmp.eq.s32.totalorder %v134, 1
  %vm139 = vcmp.eq.s32.totalorder %v137, 1
  %v140 = vsel %vm138, 0.0, %v128
  %v141 = vsel %vm139, 0.0, %v129
  %143 = vset.pattern.permute.xlu0 0
  %144 = vperm.xlu0 %143, %v60
  %v145 = vpop.permute.xlu0 %144
  %148 = vset.pattern.permute.xlu0 0
  %149 = vperm.xlu0 %148, %v61
  %v150 = vpop.permute.xlu0 %149
  %v152 = vadd.f32 %v30, %v145
  %v153 = vadd.f32 %v31, %v150
  %v154 = vsub.f32 %v152, %v140
  %v155 = vsub.f32 %v153, %v141
  %157 = vset.pattern.permute.xlu0 0
  %158 = vperm.xlu0 %157, %v50
  %v159 = vpop.permute.xlu0 %158
  %162 = vset.pattern.permute.xlu0 0
  %163 = vperm.xlu0 %162, %v51
  %v164 = vpop.permute.xlu0 %163
  %166 = vset.pattern.permute.xlu0 1
  %167 = vperm.xlu0 %166, %v44
  %v168 = vpop.permute.xlu0 %167
  %170 = vset.pattern.permute.xlu0 1
  %171 = vperm.xlu0 %170, %v45
  %v172 = vpop.permute.xlu0 %171
  %v174 = vmin.f32 %v17, %v168
  %v175 = vmin.f32 %v18, %v172
  %176 = vset.pattern.permute.xlu0 1
  %177 = vperm.xlu0 %176, %v38
  %v178 = vpop.permute.xlu0 %177
  %180 = vset.pattern.permute.xlu0 1
  %181 = vperm.xlu0 %180, %v39
  %v182 = vpop.permute.xlu0 %181
  %v184 = vmax.f32 %v11, %v178
  %v185 = vmax.f32 %v12, %v182
  %v186 = vsub.f32 %v174, %v184
  %v187 = vsub.f32 %v175, %v185
  %v188 = vadd.f32 %v186, 1.0
  %v189 = vadd.f32 %v187, 1.0
  %v190 = vmax.f32 %v188, 0.0
  %v191 = vmax.f32 %v189, 0.0
  %192 = vset.pattern.permute.xlu0 1
  %193 = vperm.xlu0 %192, %v47
  %v194 = vpop.permute.xlu0 %193
  %196 = vset.pattern.permute.xlu0 1
  %197 = vperm.xlu0 %196, %v48
  %v198 = vpop.permute.xlu0 %197
  %v200 = vmin.f32 %v20, %v194
  %v201 = vmin.f32 %v21, %v198
  %202 = vset.pattern.permute.xlu0 1
  %203 = vperm.xlu0 %202, %v41
  %v204 = vpop.permute.xlu0 %203
  %206 = vset.pattern.permute.xlu0 1
  %207 = vperm.xlu0 %206, %v42
  %v208 = vpop.permute.xlu0 %207
  %v210 = vmax.f32 %v14, %v204
  %v211 = vmax.f32 %v15, %v208
  %v212 = vsub.f32 %v200, %v210
  %v213 = vsub.f32 %v201, %v211
  %v214 = vadd.f32 %v212, 1.0
  %v215 = vadd.f32 %v213, 1.0
  %v216 = vmax.f32 %v214, 0.0
  %v217 = vmax.f32 %v215, 0.0
  %v218 = vmul.f32 %v190, %v216
  %v219 = vmul.f32 %v191, %v217
  %220 = vset.pattern.permute.xlu0 1
  %221 = vperm.xlu0 %220, %v130
  %v222 = vpop.permute.xlu0 %221
  %223 = vset.pattern.permute.xlu0 1
  %224 = vperm.xlu0 %223, %v131
  %v225 = vpop.permute.xlu0 %224
  %vm226 = vcmp.eq.s32.totalorder %v222, 1
  %vm227 = vcmp.eq.s32.totalorder %v225, 1
  %v228 = vsel %vm226, 0.0, %v218
  %v229 = vsel %vm227, 0.0, %v219
  %230 = vset.pattern.permute.xlu0 1
  %231 = vperm.xlu0 %230, %v60
  %v232 = vpop.permute.xlu0 %231
  %234 = vset.pattern.permute.xlu0 1
  %235 = vperm.xlu0 %234, %v61
  %v236 = vpop.permute.xlu0 %235
  %v238 = vadd.f32 %v30, %v232
  %v239 = vadd.f32 %v31, %v236
  %v240 = vsub.f32 %v238, %v228
  %v241 = vsub.f32 %v239, %v229
  %v242 = vmul.f32 %v228, %v154
  %v243 = vmul.f32 %v229, %v155
  %v244 = vmul.f32 %v140, %v240
  %v245 = vmul.f32 %v141, %v241
  %vm246 = vcmp.gt.f32.partialorder %v242, %v244
  %vm247 = vcmp.gt.f32.partialorder %v243, %v245
  %v248 = vsel %vm246, %v228, %v140
  %v249 = vsel %vm247, %v229, %v141
  %v250 = vsel %vm246, %v240, %v154
  %v251 = vsel %vm247, %v241, %v155
  %v252 = vsel %vm246, %v178, %v83
  %v253 = vsel %vm247, %v182, %v88
  %v254 = vsel %vm246, %v204, %v113
  %v255 = vsel %vm247, %v208, %v118
  %v256 = vsel %vm246, %v168, %v71
  %v257 = vsel %vm247, %v172, %v76
  %v258 = vsel %vm246, %v194, %v101
  %v259 = vsel %vm247, %v198, %v106
  %260 = vset.pattern.permute.xlu0 1
  %261 = vperm.xlu0 %260, %v50
  %v262 = vpop.permute.xlu0 %261
  %264 = vset.pattern.permute.xlu0 1
  %265 = vperm.xlu0 %264, %v51
  %v266 = vpop.permute.xlu0 %265
  %v268 = vsel %vm246, %v262, %v159
  %v269 = vsel %vm247, %v266, %v164
  %270 = vset.pattern.permute.xlu0 2
  %271 = vperm.xlu0 %270, %v44
  %v272 = vpop.permute.xlu0 %271
  %274 = vset.pattern.permute.xlu0 2
  %275 = vperm.xlu0 %274, %v45
  %v276 = vpop.permute.xlu0 %275
  %v278 = vmin.f32 %v17, %v272
  %v279 = vmin.f32 %v18, %v276
  %280 = vset.pattern.permute.xlu0 2
  %281 = vperm.xlu0 %280, %v38
  %v282 = vpop.permute.xlu0 %281
  %284 = vset.pattern.permute.xlu0 2
  %285 = vperm.xlu0 %284, %v39
  %v286 = vpop.permute.xlu0 %285
  %v288 = vmax.f32 %v11, %v282
  %v289 = vmax.f32 %v12, %v286
  %v290 = vsub.f32 %v278, %v288
  %v291 = vsub.f32 %v279, %v289
  %v292 = vadd.f32 %v290, 1.0
  %v293 = vadd.f32 %v291, 1.0
  %v294 = vmax.f32 %v292, 0.0
  %v295 = vmax.f32 %v293, 0.0
  %296 = vset.pattern.permute.xlu0 2
  %297 = vperm.xlu0 %296, %v47
  %v298 = vpop.permute.xlu0 %297
  %300 = vset.pattern.permute.xlu0 2
  %301 = vperm.xlu0 %300, %v48
  %v302 = vpop.permute.xlu0 %301
  %v304 = vmin.f32 %v20, %v298
  %v305 = vmin.f32 %v21, %v302
  %306 = vset.pattern.permute.xlu0 2
  %307 = vperm.xlu0 %306, %v41
  %v308 = vpop.permute.xlu0 %307
  %310 = vset.pattern.permute.xlu0 2
  %311 = vperm.xlu0 %310, %v42
  %v312 = vpop.permute.xlu0 %311
  %v314 = vmax.f32 %v14, %v308
  %v315 = vmax.f32 %v15, %v312
  %v316 = vsub.f32 %v304, %v314
  %v317 = vsub.f32 %v305, %v315
  %v318 = vadd.f32 %v316, 1.0
  %v319 = vadd.f32 %v317, 1.0
  %v320 = vmax.f32 %v318, 0.0
  %v321 = vmax.f32 %v319, 0.0
  %v322 = vmul.f32 %v294, %v320
  %v323 = vmul.f32 %v295, %v321
  %324 = vset.pattern.permute.xlu0 2
  %325 = vperm.xlu0 %324, %v130
  %v326 = vpop.permute.xlu0 %325
  %327 = vset.pattern.permute.xlu0 2
  %328 = vperm.xlu0 %327, %v131
  %v329 = vpop.permute.xlu0 %328
  %vm330 = vcmp.eq.s32.totalorder %v326, 1
  %vm331 = vcmp.eq.s32.totalorder %v329, 1
  %v332 = vsel %vm330, 0.0, %v322
  %v333 = vsel %vm331, 0.0, %v323
  %334 = vset.pattern.permute.xlu0 2
  %335 = vperm.xlu0 %334, %v60
  %v336 = vpop.permute.xlu0 %335
  %338 = vset.pattern.permute.xlu0 2
  %339 = vperm.xlu0 %338, %v61
  %v340 = vpop.permute.xlu0 %339
  %v342 = vadd.f32 %v30, %v336
  %v343 = vadd.f32 %v31, %v340
  %v344 = vsub.f32 %v342, %v332
  %v345 = vsub.f32 %v343, %v333
  %v346 = vmul.f32 %v332, %v250
  %v347 = vmul.f32 %v333, %v251
  %v348 = vmul.f32 %v248, %v344
  %v349 = vmul.f32 %v249, %v345
  %vm350 = vcmp.gt.f32.partialorder %v346, %v348
  %vm351 = vcmp.gt.f32.partialorder %v347, %v349
  %v352 = vsel %vm350, %v332, %v248
  %v353 = vsel %vm351, %v333, %v249
  %v354 = vsel %vm350, %v344, %v250
  %v355 = vsel %vm351, %v345, %v251
  %v356 = vsel %vm350, %v282, %v252
  %v357 = vsel %vm351, %v286, %v253
  %v358 = vsel %vm350, %v308, %v254
  %v359 = vsel %vm351, %v312, %v255
  %v360 = vsel %vm350, %v272, %v256
  %v361 = vsel %vm351, %v276, %v257
  %v362 = vsel %vm350, %v298, %v258
  %v363 = vsel %vm351, %v302, %v259
  %364 = vset.pattern.permute.xlu0 2
  %365 = vperm.xlu0 %364, %v50
  %v366 = vpop.permute.xlu0 %365
  %368 = vset.pattern.permute.xlu0 2
  %369 = vperm.xlu0 %368, %v51
  %v370 = vpop.permute.xlu0 %369
  %v372 = vsel %vm350, %v366, %v268
  %v373 = vsel %vm351, %v370, %v269
  %v374 = vrcp.pop %v354
  %v375 = vmul.f32 %v354, %v374
  %v376 = vsub.f32 1.0, %v375
  %v377 = vmul.f32 %v374, %v376
  %v378 = vadd.f32 %v374, %v377
  %vm379 = vweird.f32 %v354
  %vm380 = vweird.f32 %v374
  %vm381 = vmor %vm379, %vm380
  %v382 = vsel %vm381, %v374, %v378
  %v383 = vand.u32 2147483647, %v354
  %vm384 = vcmp.eq.f32.partialorder %v383, 8.507059e+37
  %v385 = vand.u32 %v354, 2147483648
  %v386 = vor.u32 1.1754944e-38, %v385
  %v387 = vsel %vm384, %v386, %v382
  %v388 = vrcp.pop %v355
  %v389 = vmul.f32 %v355, %v388
  %v390 = vsub.f32 1.0, %v389
  %v391 = vmul.f32 %v388, %v390
  %v392 = vadd.f32 %v388, %v391
  %vm393 = vweird.f32 %v355
  %vm394 = vweird.f32 %v388
  %vm395 = vmor %vm393, %vm394
  %v396 = vsel %vm395, %v388, %v392
  %v397 = vand.u32 2147483647, %v355
  %vm398 = vcmp.eq.f32.partialorder %v397, 8.507059e+37
  %v399 = vand.u32 %v355, 2147483648
  %v400 = vor.u32 1.1754944e-38, %v399
  %v401 = vsel %vm398, %v400, %v396
  %v402 = vmul.f32 %v352, %v387
  %v403 = vmul.f32 %v353, %v401
  %v404 = vsel %vm36, -1.0, %v402
  %v405 = vsel %vm37, -1.0, %v403
  %406 = vst [vmem:[%s2] sm:$0xff] %v11
  %407 = vst [vmem:[%s2 + $0x8] sm:$0xff] %v12
  %s408 = scalar_lea.vmem %s2, 16
  %409 = vst [vmem:[%s408] sm:$0xff] %v14
  %410 = vst [vmem:[%s408 + $0x8] sm:$0xff] %v15
  %s411 = scalar_lea.vmem %s2, 32
  %412 = vst [vmem:[%s411] sm:$0xff] %v17
  %413 = vst [vmem:[%s411 + $0x8] sm:$0xff] %v18
  %s414 = scalar_lea.vmem %s2, 48
  %415 = vst [vmem:[%s414] sm:$0xff] %v20
  %416 = vst [vmem:[%s414 + $0x8] sm:$0xff] %v21
  %s417 = scalar_lea.vmem %s2, 64
  %418 = vst [vmem:[%s417] sm:$0xff] %v356
  %419 = vst [vmem:[%s417 + $0x8] sm:$0xff] %v357
  %s420 = scalar_lea.vmem %s2, 80
  %421 = vst [vmem:[%s420] sm:$0xff] %v358
  %422 = vst [vmem:[%s420 + $0x8] sm:$0xff] %v359
  %s423 = scalar_lea.vmem %s2, 96
  %424 = vst [vmem:[%s423] sm:$0xff] %v360
  %425 = vst [vmem:[%s423 + $0x8] sm:$0xff] %v361
  %s426 = scalar_lea.vmem %s2, 112
  %427 = vst [vmem:[%s426] sm:$0xff] %v362
  %428 = vst [vmem:[%s426 + $0x8] sm:$0xff] %v363
  %s429 = scalar_lea.vmem %s2, 128
  %430 = vst [vmem:[%s429] sm:$0xff] %v372
  %431 = vst [vmem:[%s429 + $0x8] sm:$0xff] %v373
  %s432 = scalar_lea.vmem %s2, 144
  %433 = vst [vmem:[%s432] sm:$0xff] %v404
  %434 = vst [vmem:[%s432 + $0x8] sm:$0xff] %v405
  // Predicated region
  $region10: #{regression_target_forward.2} parent=0 // pred_check
    _
  $region11: #{regression_target_forward.2} parent=0 // pred_check_branch
    %436 = sbr.rel (0) target = $region13
  $region12: #{regression_target_forward.2} parent=0 // pred_region
    _
  $region13: #{regression_target_forward.2} parent=0 // pred_fallthru
    _
  // Predicated region
  $region14: #{regression_target_forward.2} parent=0 // pred_check
    _
  $region15: #{regression_target_forward.2} parent=0 // pred_check_branch
    %438 = sbr.rel (0) target = $region17
  $region16: #{regression_target_forward.2} parent=0 // pred_region
    _
  $region17: #{regression_target_forward.2} parent=0 // pred_fallthru
    _

// kernel: regression_target_forward.3
$region0: #{regression_target_forward.3}
  #allocation0 [shape = 'u32[]', space=smem, size = 0x4, offset = 0x4, fixed_abs, tag = 'smem constant byte address 0x4 - core index']
  #allocation1 [shape = 'u32[72,128]{1,0:T(1,128)}', space=vmem, size = 0x9000, scoped, tag = 'internal scratch']
  %s0 = inlined_call_operand.vmem [shape: f32[9,8,128], index: 0, kind: input, shape index: {}]
  %s1 = inlined_call_operand.vmem [shape: f32[12,8,128], index: 1, kind: output, shape index: {}]
  %s2 = sld [smem:[#allocation0]]
  $region14: #{regression_target_forward.3} parent=0
    _
  %s4 = ssub.s32 1, %s2
  %s5 = scalar_select 0, %s4, %s2
  // Predicated region
  $region2: #{regression_target_forward.3} parent=0 // pred_check
    _
  $region3: #{regression_target_forward.3} parent=0 // pred_check_branch
    %7 = sbr.rel (0) target = $region5
  $region4: #{regression_target_forward.3} parent=0 // pred_region
    _
  $region5: #{regression_target_forward.3} parent=0 // pred_fallthru
    _
  %v8 = vld [vmem:[%s0] sm:$0xff]
  %s9 = scalar_lea.vmem %s0, 8
  %v10 = vld [vmem:[%s9] sm:$0xff]
  %s11 = scalar_lea.vmem %s0, 16
  %v12 = vld [vmem:[%s11] sm:$0xff]
  %s13 = scalar_lea.vmem %s0, 24
  %v14 = vld [vmem:[%s13] sm:$0xff]
  %s15 = scalar_lea.vmem %s0, 32
  %v16 = vld [vmem:[%s15] sm:$0xff]
  %s17 = scalar_lea.vmem %s0, 40
  %v18 = vld [vmem:[%s17] sm:$0xff]
  %s19 = scalar_lea.vmem %s0, 48
  %v20 = vld [vmem:[%s19] sm:$0xff]
  %s21 = scalar_lea.vmem %s0, 56
  %v22 = vld [vmem:[%s21] sm:$0xff]
  %s23 = scalar_lea.vmem %s0, 64
  %v24 = vld [vmem:[%s23] sm:$0xff]
  %v25 = vsub.f32 %v12, %v8
  %v26 = vadd.f32 %v25, 1.0
  %v27 = vsub.f32 %v14, %v10
  %v28 = vadd.f32 %v27, 1.0
  %v29 = vsub.f32 %v20, %v16
  %v30 = vadd.f32 %v29, 1.0
  %v31 = vsub.f32 %v22, %v18
  %v32 = vadd.f32 %v31, 1.0
  %v33 = vrcp.pop %v26
  %v34 = vrcp.pop %v28
  %v35 = vmul.f32 %v26, 0.5
  %v36 = vadd.f32 %v8, %v35
  %v37 = vmul.f32 %v28, 0.5
  %v38 = vadd.f32 %v10, %v37
  %v39 = vmul.f32 %v30, 0.5
  %v40 = vadd.f32 %v16, %v39
  %v41 = vmul.f32 %v32, 0.5
  %v42 = vadd.f32 %v18, %v41
  %v43 = vsub.f32 %v40, %v36
  %v44 = vmul.f32 %v43, %v33
  %v45 = vsub.f32 %v42, %v38
  %v46 = vmul.f32 %v45, %v34
  %v47 = vmul.f32 %v30, %v33
  %v48 = vlog2.pop %v47
  %v49 = vmul.f32 %v48, 0.6931472
  %v50 = vmul.f32 %v32, %v34
  %v51 = vlog2.pop %v50
  %v52 = vmul.f32 %v51, 0.6931472
  %v53 = vmul.f32 %v44, 10.0
  %v54 = vmul.f32 %v46, 10.0
  %v55 = vmul.f32 %v49, 5.0
  %v56 = vmul.f32 %v52, 5.0
  %vm57 = vcmp.gt.f32.partialorder %v24, 0.0
  %v58 = vsel %vm57, 1, 0
  %v59 = vcvt.s32.f32 %v58
  %v60 = vmul.f32 %v53, %v59
  %61 = vst [vmem:[%s1] sm:$0xff] %v60
  %s62 = scalar_lea.vmem %s1, 32
  %63 = vst [vmem:[%s62] sm:$0xff] %v59
  %vm64 = vcmp.gt.f32.partialorder %v59, 0.0
  %v65 = vsel %vm64, 1.0, 0.0
  %s66 = scalar_lea.vmem %s1, 64
  %67 = vst [vmem:[%s66] sm:$0xff] %v65
  %v68 = vmul.f32 %v54, %v59
  %s69 = scalar_lea.vmem %s1, 8
  %70 = vst [vmem:[%s69] sm:$0xff] %v68
  %s71 = scalar_lea.vmem %s1, 40
  %72 = vst [vmem:[%s71] sm:$0xff] %v59
  %s73 = scalar_lea.vmem %s1, 72
  %74 = vst [vmem:[%s73] sm:$0xff] %v65
  %v75 = vmul.f32 %v55, %v59
  %s76 = scalar_lea.vmem %s1, 16
  %77 = vst [vmem:[%s76] sm:$0xff] %v75
  %s78 = scalar_lea.vmem %s1, 48
  %79 = vst [vmem:[%s78] sm:$0xff] %v59
  %s80 = scalar_lea.vmem %s1, 80
  %81 = vst [vmem:[%s80] sm:$0xff] %v65
  %v82 = vmul.f32 %v56, %v59
  %s83 = scalar_lea.vmem %s1, 24
  %84 = vst [vmem:[%s83] sm:$0xff] %v82
  %s85 = scalar_lea.vmem %s1, 56
  %86 = vst [vmem:[%s85] sm:$0xff] %v59
  %s87 = scalar_lea.vmem %s1, 88
  %88 = vst [vmem:[%s87] sm:$0xff] %v65
  // Predicated region
  $region6: #{regression_target_forward.3} parent=0 // pred_check
    _
  $region7: #{regression_target_forward.3} parent=0 // pred_check_branch
    %90 = sbr.rel (0) target = $region9
  $region8: #{regression_target_forward.3} parent=0 // pred_region
    _
  $region9: #{regression_target_forward.3} parent=0 // pred_fallthru
    _
  // Predicated region
  $region10: #{regression_target_forward.3} parent=0 // pred_check
    _
  $region11: #{regression_target_forward.3} parent=0 // pred_check_branch
    %92 = sbr.rel (0) target = $region13
  $region12: #{regression_target_forward.3} parent=0 // pred_region
    _
  $region13: #{regression_target_forward.3} parent=0 // pred_fallthru
    _

</llo_original>
